<compile_context>
chip_gen: v6e
topology: v6e:2x2x1
jax: 0.10.0
libtpu: 0.0.40
codegen_flags: <defaults>
</compile_context>

<pallas_src>
import jax
import jax.numpy as jnp
from jax import lax
from jax.experimental import pallas as pl
from jax.experimental.pallas import tpu as pltpu


# ---------------------------------------------------------------------------
# Fused GRU layer kernel: input projection + recurrence for a (TT, TB) block.
#
#   x_ref   : (TT, TB, IN) f32   -- this layer's inputs (embedding or prev h)
#   wi_ref  : (IN, 3H)     bf16  -- packed [Wir | Wiz | Win] (transposed)
#   wh_ref  : (H, 3H)      bf16  -- packed [Whr | Whz | Whn] (transposed)
#   bin_ref : (1, 3H)      f32   -- (bi_r+bh_r, bi_z+bh_z, bi_n) pre-folded
#   bhn_ref : (1, H)       f32   -- bh_n (sits behind the r gate)
#   out_ref : (TT, TB, H)  f32   -- hidden state at every timestep
#   h_scratch: (TB, H)     f32   -- carried hidden state across time blocks
# ---------------------------------------------------------------------------
def _gru_layer_kernel(x_ref, wi_ref, wh_ref, bin_ref, bhn_ref, out_ref, h_scratch):
    H = wh_ref.shape[0]
    TT = x_ref.shape[0]
    TB = h_scratch.shape[0]

    @pl.when(pl.program_id(1) == 0)               # time axis restart => h0 = 0
    def _():
        h_scratch[...] = jnp.zeros_like(h_scratch)

    wi = wi_ref[...]                              # resident bf16 weights
    wh = wh_ref[...]
    # Hoist bias broadcasts out of the time loop (JAX doesn't CSE them).
    b_in = jnp.broadcast_to(bin_ref[...], (TB, 3 * H))
    bh_n = jnp.broadcast_to(bhn_ref[...], (TB, H))

    def step(tt, h):
        # x-side projection: independent of h, so the scheduler can overlap
        # it with the previous step's gate math inside the unrolled block.
        x_t = x_ref[tt].astype(wi.dtype)                              # (TB, IN)
        xp = jnp.dot(x_t, wi, preferred_element_type=jnp.float32) + b_in
        # h-side: one packed MXU matmul for all three gates.
        g = jnp.dot(h.astype(wh.dtype), wh, preferred_element_type=jnp.float32)
        r = jax.nn.sigmoid(xp[:, 0:H] + g[:, 0:H])
        z = jax.nn.sigmoid(xp[:, H:2 * H] + g[:, H:2 * H])
        n = jnp.tanh(xp[:, 2 * H:3 * H] + r * (g[:, 2 * H:3 * H] + bh_n))
        h_new = (1.0 - z) * n + z * h
        out_ref[tt] = h_new.astype(out_ref.dtype)
        return h_new

    h_final = lax.fori_loop(0, TT, step, h_scratch[...], unroll=True)
    h_scratch[...] = h_final


def _largest_divisor_leq(n, cap):
    for d in range(min(cap, n), 0, -1):
        if n % d == 0:
            return d
    return 1


def gru_layer(x, wi_packed, wh_packed, b_in, bh_n, *, time_block=16, batch_block=None):
    """One GRU layer over time-major inputs.

    x (T, B, IN) f32 -> outputs (T, B, H) f32 (last row = final hidden state).
    """
    T, B, IN = x.shape
    H = wh_packed.shape[0]
    threeH = 3 * H
    TT = _largest_divisor_leq(T, time_block)      # timesteps per grid step
    TB = batch_block or B                         # batch block ("parallel" axis)
    assert B % TB == 0

    grid_spec = pltpu.PrefetchScalarGridSpec(
        num_scalar_prefetch=0,
        grid=(B // TB, T // TT),                  # (parallel batch, sequential time)
        in_specs=[
            pl.BlockSpec((TT, TB, IN), lambda b, t: (t, b, 0)),
            pl.BlockSpec((IN, threeH), lambda b, t: (0, 0)),
            pl.BlockSpec((H, threeH), lambda b, t: (0, 0)),
            pl.BlockSpec((1, threeH), lambda b, t: (0, 0)),
            pl.BlockSpec((1, H), lambda b, t: (0, 0)),
        ],
        out_specs=pl.BlockSpec((TT, TB, H), lambda b, t: (t, b, 0)),
        scratch_shapes=[pltpu.VMEM((TB, H), jnp.float32)],
    )

    return pl.pallas_call(
        _gru_layer_kernel,
        out_shape=jax.ShapeDtypeStruct((T, B, H), jnp.float32),
        grid_spec=grid_spec,
        compiler_params=pltpu.CompilerParams(
            # Batch is independent (megacore-shardable on v7x); time is a
            # recurrence and must stay sequential.
            dimension_semantics=("parallel", "arbitrary"),
        ),
    )(x, wi_packed, wh_packed, b_in, bh_n)


# ---------------------------------------------------------------------------
# Parameter construction (mirrors torch.nn.GRU layout, then packs/folds)
# ---------------------------------------------------------------------------
def pack_gru_layer(wi, wh, bi, bh, weight_dtype=jnp.bfloat16):
    """wi (3,in,H), wh (3,H,H), bi/bh (3,H) with gate order (r, z, n)."""
    wi_packed = jnp.concatenate([wi[0], wi[1], wi[2]], axis=-1).astype(weight_dtype)
    wh_packed = jnp.concatenate([wh[0], wh[1], wh[2]], axis=-1).astype(weight_dtype)
    # Fold the biases that don't sit behind the r-gate into the input projection.
    b_in = jnp.concatenate([bi[0] + bh[0], bi[1] + bh[1], bi[2]], axis=-1)[None, :]
    bh_n = bh[2][None, :]
    return {"wi": wi_packed, "wh": wh_packed, "b_in": b_in, "bh_n": bh_n}


def init_encoder_params(key, vocab_size, embed_size, num_hiddens, num_layers):
    params = {}
    k_emb, key = jax.random.split(key)
    params["embedding"] = (
        jax.random.normal(k_emb, (vocab_size, embed_size), jnp.float32) * 0.1
    )
    layers = []
    for layer in range(num_layers):
        in_size = embed_size if layer == 0 else num_hiddens
        k1, k2, k3, k4, key = jax.random.split(key, 5)
        # PyTorch weight_ih/weight_hh transposed & gate-split, order (r, z, n).
        wi = jax.random.normal(k1, (3, in_size, num_hiddens), jnp.float32) * 0.1
        wh = jax.random.normal(k2, (3, num_hiddens, num_hiddens), jnp.float32) * 0.1
        bi = jax.random.normal(k3, (3, num_hiddens), jnp.float32) * 0.1
        bh = jax.random.normal(k4, (3, num_hiddens), jnp.float32) * 0.1
        layers.append(pack_gru_layer(wi, wh, bi, bh))
    params["gru"] = layers
    return params


# ---------------------------------------------------------------------------
# Encoder forward:  output (T, B, H), state (num_layers, B, H)
# ---------------------------------------------------------------------------
@jax.jit
def seq2seq_encoder_forward(params, X):
    """X (B, T) int32 token ids -> (output (T,B,H), state (L,B,H))."""
    # Embedding lookup + time-major permute as a single XLA gather (no clean
    # rectangular BlockSpec exists for a token-indexed gather).
    # TODO(synk): inter-layer dropout (training-only in nn.GRU) is omitted.
    x = params["embedding"][X.T]                   # (T, B, E) f32

    finals = []
    for lp in params["gru"]:
        x = gru_layer(x, lp["wi"], lp["wh"], lp["b_in"], lp["bh_n"])
        finals.append(x[-1])                       # final hidden of this layer
    output = x                                     # (T, B, H), top layer
    state = jnp.stack(finals, axis=0)              # (num_layers, B, H)
    return output, state


if __name__ == "__main__":
    vocab_size = 16
    embed_size = 32
    num_hiddens = 32
    num_layers = 2
    batch = 2
    seq_len = 8

    key = jax.random.PRNGKey(0)
    k_params, k_tokens = jax.random.split(key)
    params = init_encoder_params(
        k_params, vocab_size, embed_size, num_hiddens, num_layers
    )
    X = jax.random.randint(k_tokens, (batch, seq_len), 0, vocab_size, jnp.int32)

    output, state = seq2seq_encoder_forward(params, X)
    jax.block_until_ready((output, state))

    assert output.shape == (seq_len, batch, num_hiddens)
    assert state.shape == (num_layers, batch, num_hiddens)
    print("KERNEL_OK")
</pallas_src>

<mosaic_0001>
module attributes {stable_mosaic.version = 11 : i64} {
  func.func @_gru_layer_kernel(%arg0: i32, %arg1: i32, %arg2: memref<8x2x32xf32, #tpu.memory_space<vmem>>, %arg3: memref<32x96xbf16, #tpu.memory_space<vmem>>, %arg4: memref<32x96xbf16, #tpu.memory_space<vmem>>, %arg5: memref<1x96xf32, #tpu.memory_space<vmem>>, %arg6: memref<1x32xf32, #tpu.memory_space<vmem>>, %arg7: memref<8x2x32xf32, #tpu.memory_space<vmem>>, %arg8: memref<2x32xf32, #tpu.memory_space<vmem>>) attributes {dimension_semantics = [#tpu.dimension_semantics<parallel>, #tpu.dimension_semantics<arbitrary>], iteration_bounds = array<i64: 1, 1>, scalar_prefetch = 0 : i64, scratch_operands = 1 : i64, tpu.core_type = #tpu.core_type<tc>, window_params = [{transform_indices = @transform_0, window_bounds = array<i64: 8, 2, 32>}, {pipeline_mode = #tpu.pipeline_mode<synchronous>, transform_indices = @transform_1, window_bounds = array<i64: 32, 96>}, {pipeline_mode = #tpu.pipeline_mode<synchronous>, transform_indices = @transform_2, window_bounds = array<i64: 32, 96>}, {pipeline_mode = #tpu.pipeline_mode<synchronous>, transform_indices = @transform_3, window_bounds = array<i64: 1, 96>}, {pipeline_mode = #tpu.pipeline_mode<synchronous>, transform_indices = @transform_4, window_bounds = array<i64: 1, 32>}, {transform_indices = @transform_5, window_bounds = array<i64: 8, 2, 32>}]} {
    %c0_i32 = arith.constant 0 : i32
    %0 = arith.cmpi eq, %arg1, %c0_i32 : i32
    %1 = arith.extui %0 : i1 to i32
    %c0_i32_0 = arith.constant 0 : i32
    %2 = arith.cmpi ne, %1, %c0_i32_0 : i32
    scf.if %2 {
      %cst_84 = arith.constant 0.000000e+00 : f32
      %325 = vector.broadcast %cst_84 : f32 to vector<2x32xf32>
      %c0_85 = arith.constant 0 : index
      %c0_86 = arith.constant 0 : index
      %326 = vector.load %arg8[%c0_85, %c0_86] : memref<2x32xf32, #tpu.memory_space<vmem>>, vector<2x32xf32>
      tpu.vector_store %arg8[%c0_85, %c0_86], %325 {strides = array<i32>} : memref<2x32xf32, #tpu.memory_space<vmem>>, vector<2x32xf32>,
    } else {
    }
    %c0 = arith.constant 0 : index
    %c0_1 = arith.constant 0 : index
    %3 = vector.load %arg3[%c0, %c0_1] : memref<32x96xbf16, #tpu.memory_space<vmem>>, vector<32x96xbf16>
    %c0_2 = arith.constant 0 : index
    %c0_3 = arith.constant 0 : index
    %4 = vector.load %arg4[%c0_2, %c0_3] : memref<32x96xbf16, #tpu.memory_space<vmem>>, vector<32x96xbf16>
    %c0_4 = arith.constant 0 : index
    %c0_5 = arith.constant 0 : index
    %5 = vector.load %arg5[%c0_4, %c0_5] : memref<1x96xf32, #tpu.memory_space<vmem>>, vector<1x96xf32>
    %6 = vector.shape_cast %5 : vector<1x96xf32> to vector<1x96xf32>
    %7 = vector.broadcast %6 : vector<1x96xf32> to vector<2x96xf32>
    %c0_6 = arith.constant 0 : index
    %c0_7 = arith.constant 0 : index
    %8 = vector.load %arg6[%c0_6, %c0_7] : memref<1x32xf32, #tpu.memory_space<vmem>>, vector<1x32xf32>
    %9 = vector.shape_cast %8 : vector<1x32xf32> to vector<1x32xf32>
    %10 = vector.broadcast %9 : vector<1x32xf32> to vector<2x32xf32>
    %c0_8 = arith.constant 0 : index
    %c0_9 = arith.constant 0 : index
    %11 = vector.load %arg8[%c0_8, %c0_9] : memref<2x32xf32, #tpu.memory_space<vmem>>, vector<2x32xf32>
    %c0_i32_10 = arith.constant 0 : i32
    %12 = arith.index_cast %c0_i32_10 : i32 to index
    %c0_11 = arith.constant 0 : index
    %c0_12 = arith.constant 0 : index
    %13 = vector.load %arg2[%12, %c0_11, %c0_12] : memref<8x2x32xf32, #tpu.memory_space<vmem>>, vector<1x2x32xf32>
    %14 = vector.shape_cast %13 : vector<1x2x32xf32> to vector<2x32xf32>
    %15 = arith.truncf %14 : vector<2x32xf32> to vector<2x32xbf16>
    %cst = arith.constant dense<0.000000e+00> : vector<2x96xf32>
    %16 = tpu.matmul %15, %3, %cst {dimension_numbers = #tpu.dot_dimension_numbers<[1], [0], [0], [1], [0, 0, 1, 1], [], []>} : vector<2x32xbf16>, vector<32x96xbf16>, vector<2x96xf32> -> vector<2x96xf32>
    %17 = arith.addf %16, %7 : vector<2x96xf32>
    %18 = arith.truncf %11 : vector<2x32xf32> to vector<2x32xbf16>
    %cst_13 = arith.constant dense<0.000000e+00> : vector<2x96xf32>
    %19 = tpu.matmul %18, %4, %cst_13 {dimension_numbers = #tpu.dot_dimension_numbers<[1], [0], [0], [1], [0, 0, 1, 1], [], []>} : vector<2x32xbf16>, vector<32x96xbf16>, vector<2x96xf32> -> vector<2x96xf32>
    %20 = vector.extract_strided_slice %17 {offsets = [0, 0], sizes = [2, 32], strides = [1, 1]} : vector<2x96xf32> to vector<2x32xf32>
    %21 = vector.extract_strided_slice %19 {offsets = [0, 0], sizes = [2, 32], strides = [1, 1]} : vector<2x96xf32> to vector<2x32xf32>
    %22 = arith.addf %20, %21 : vector<2x32xf32>
    %23 = arith.negf %22 : vector<2x32xf32>
    %24 = math.exp %23 : vector<2x32xf32>
    %cst_14 = arith.constant 1.000000e+00 : f32
    %25 = vector.broadcast %cst_14 : f32 to vector<2x32xf32>
    %26 = arith.addf %25, %24 : vector<2x32xf32>
    %27 = arith.divf %25, %26 : vector<2x32xf32>
    %28 = vector.extract_strided_slice %17 {offsets = [0, 32], sizes = [2, 32], strides = [1, 1]} : vector<2x96xf32> to vector<2x32xf32>
    %29 = vector.extract_strided_slice %19 {offsets = [0, 32], sizes = [2, 32], strides = [1, 1]} : vector<2x96xf32> to vector<2x32xf32>
    %30 = arith.addf %28, %29 : vector<2x32xf32>
    %31 = arith.negf %30 : vector<2x32xf32>
    %32 = math.exp %31 : vector<2x32xf32>
    %cst_15 = arith.constant 1.000000e+00 : f32
    %33 = vector.broadcast %cst_15 : f32 to vector<2x32xf32>
    %34 = arith.addf %33, %32 : vector<2x32xf32>
    %35 = arith.divf %33, %34 : vector<2x32xf32>
    %36 = vector.extract_strided_slice %17 {offsets = [0, 64], sizes = [2, 32], strides = [1, 1]} : vector<2x96xf32> to vector<2x32xf32>
    %37 = vector.extract_strided_slice %19 {offsets = [0, 64], sizes = [2, 32], strides = [1, 1]} : vector<2x96xf32> to vector<2x32xf32>
    %38 = arith.addf %37, %10 : vector<2x32xf32>
    %39 = arith.mulf %27, %38 : vector<2x32xf32>
    %40 = arith.addf %36, %39 : vector<2x32xf32>
    %41 = math.tanh %40 : vector<2x32xf32>
    %cst_16 = arith.constant 1.000000e+00 : f32
    %42 = vector.broadcast %cst_16 : f32 to vector<2x32xf32>
    %43 = arith.subf %42, %35 : vector<2x32xf32>
    %44 = arith.mulf %43, %41 : vector<2x32xf32>
    %45 = arith.mulf %35, %11 : vector<2x32xf32>
    %46 = arith.addf %44, %45 : vector<2x32xf32>
    %47 = arith.index_cast %c0_i32_10 : i32 to index
    %c0_17 = arith.constant 0 : index
    %c0_18 = arith.constant 0 : index
    %48 = vector.load %arg7[%47, %c0_17, %c0_18] : memref<8x2x32xf32, #tpu.memory_space<vmem>>, vector<1x2x32xf32>
    %49 = vector.shape_cast %48 : vector<1x2x32xf32> to vector<2x32xf32>
    %50 = vector.shape_cast %46 : vector<2x32xf32> to vector<1x2x32xf32>
    tpu.vector_store %arg7[%47, %c0_17, %c0_18], %50 {strides = array<i32>} : memref<8x2x32xf32, #tpu.memory_space<vmem>>, vector<1x2x32xf32>,
    %c1_i32 = arith.constant 1 : i32
    %51 = arith.index_cast %c1_i32 : i32 to index
    %c0_19 = arith.constant 0 : index
    %c0_20 = arith.constant 0 : index
    %52 = vector.load %arg2[%51, %c0_19, %c0_20] : memref<8x2x32xf32, #tpu.memory_space<vmem>>, vector<1x2x32xf32>
    %53 = vector.shape_cast %52 : vector<1x2x32xf32> to vector<2x32xf32>
    %54 = arith.truncf %53 : vector<2x32xf32> to vector<2x32xbf16>
    %cst_21 = arith.constant dense<0.000000e+00> : vector<2x96xf32>
    %55 = tpu.matmul %54, %3, %cst_21 {dimension_numbers = #tpu.dot_dimension_numbers<[1], [0], [0], [1], [0, 0, 1, 1], [], []>} : vector<2x32xbf16>, vector<32x96xbf16>, vector<2x96xf32> -> vector<2x96xf32>
    %56 = arith.addf %55, %7 : vector<2x96xf32>
    %57 = arith.truncf %46 : vector<2x32xf32> to vector<2x32xbf16>
    %cst_22 = arith.constant dense<0.000000e+00> : vector<2x96xf32>
    %58 = tpu.matmul %57, %4, %cst_22 {dimension_numbers = #tpu.dot_dimension_numbers<[1], [0], [0], [1], [0, 0, 1, 1], [], []>} : vector<2x32xbf16>, vector<32x96xbf16>, vector<2x96xf32> -> vector<2x96xf32>
    %59 = vector.extract_strided_slice %56 {offsets = [0, 0], sizes = [2, 32], strides = [1, 1]} : vector<2x96xf32> to vector<2x32xf32>
    %60 = vector.extract_strided_slice %58 {offsets = [0, 0], sizes = [2, 32], strides = [1, 1]} : vector<2x96xf32> to vector<2x32xf32>
    %61 = arith.addf %59, %60 : vector<2x32xf32>
    %62 = arith.negf %61 : vector<2x32xf32>
    %63 = math.exp %62 : vector<2x32xf32>
    %cst_23 = arith.constant 1.000000e+00 : f32
    %64 = vector.broadcast %cst_23 : f32 to vector<2x32xf32>
    %65 = arith.addf %64, %63 : vector<2x32xf32>
    %66 = arith.divf %64, %65 : vector<2x32xf32>
    %67 = vector.extract_strided_slice %56 {offsets = [0, 32], sizes = [2, 32], strides = [1, 1]} : vector<2x96xf32> to vector<2x32xf32>
    %68 = vector.extract_strided_slice %58 {offsets = [0, 32], sizes = [2, 32], strides = [1, 1]} : vector<2x96xf32> to vector<2x32xf32>
    %69 = arith.addf %67, %68 : vector<2x32xf32>
    %70 = arith.negf %69 : vector<2x32xf32>
    %71 = math.exp %70 : vector<2x32xf32>
    %cst_24 = arith.constant 1.000000e+00 : f32
    %72 = vector.broadcast %cst_24 : f32 to vector<2x32xf32>
    %73 = arith.addf %72, %71 : vector<2x32xf32>
    %74 = arith.divf %72, %73 : vector<2x32xf32>
    %75 = vector.extract_strided_slice %56 {offsets = [0, 64], sizes = [2, 32], strides = [1, 1]} : vector<2x96xf32> to vector<2x32xf32>
    %76 = vector.extract_strided_slice %58 {offsets = [0, 64], sizes = [2, 32], strides = [1, 1]} : vector<2x96xf32> to vector<2x32xf32>
    %77 = arith.addf %76, %10 : vector<2x32xf32>
    %78 = arith.mulf %66, %77 : vector<2x32xf32>
    %79 = arith.addf %75, %78 : vector<2x32xf32>
    %80 = math.tanh %79 : vector<2x32xf32>
    %cst_25 = arith.constant 1.000000e+00 : f32
    %81 = vector.broadcast %cst_25 : f32 to vector<2x32xf32>
    %82 = arith.subf %81, %74 : vector<2x32xf32>
    %83 = arith.mulf %82, %80 : vector<2x32xf32>
    %84 = arith.mulf %74, %46 : vector<2x32xf32>
    %85 = arith.addf %83, %84 : vector<2x32xf32>
    %86 = arith.index_cast %c1_i32 : i32 to index
    %c0_26 = arith.constant 0 : index
    %c0_27 = arith.constant 0 : index
    %87 = vector.load %arg7[%86, %c0_26, %c0_27] : memref<8x2x32xf32, #tpu.memory_space<vmem>>, vector<1x2x32xf32>
    %88 = vector.shape_cast %87 : vector<1x2x32xf32> to vector<2x32xf32>
    %89 = vector.shape_cast %85 : vector<2x32xf32> to vector<1x2x32xf32>
    tpu.vector_store %arg7[%86, %c0_26, %c0_27], %89 {strides = array<i32>} : memref<8x2x32xf32, #tpu.memory_space<vmem>>, vector<1x2x32xf32>,
    %c2_i32 = arith.constant 2 : i32
    %90 = arith.index_cast %c2_i32 : i32 to index
    %c0_28 = arith.constant 0 : index
    %c0_29 = arith.constant 0 : index
    %91 = vector.load %arg2[%90, %c0_28, %c0_29] : memref<8x2x32xf32, #tpu.memory_space<vmem>>, vector<1x2x32xf32>
    %92 = vector.shape_cast %91 : vector<1x2x32xf32> to vector<2x32xf32>
    %93 = arith.truncf %92 : vector<2x32xf32> to vector<2x32xbf16>
    %cst_30 = arith.constant dense<0.000000e+00> : vector<2x96xf32>
    %94 = tpu.matmul %93, %3, %cst_30 {dimension_numbers = #tpu.dot_dimension_numbers<[1], [0], [0], [1], [0, 0, 1, 1], [], []>} : vector<2x32xbf16>, vector<32x96xbf16>, vector<2x96xf32> -> vector<2x96xf32>
    %95 = arith.addf %94, %7 : vector<2x96xf32>
    %96 = arith.truncf %85 : vector<2x32xf32> to vector<2x32xbf16>
    %cst_31 = arith.constant dense<0.000000e+00> : vector<2x96xf32>
    %97 = tpu.matmul %96, %4, %cst_31 {dimension_numbers = #tpu.dot_dimension_numbers<[1], [0], [0], [1], [0, 0, 1, 1], [], []>} : vector<2x32xbf16>, vector<32x96xbf16>, vector<2x96xf32> -> vector<2x96xf32>
    %98 = vector.extract_strided_slice %95 {offsets = [0, 0], sizes = [2, 32], strides = [1, 1]} : vector<2x96xf32> to vector<2x32xf32>
    %99 = vector.extract_strided_slice %97 {offsets = [0, 0], sizes = [2, 32], strides = [1, 1]} : vector<2x96xf32> to vector<2x32xf32>
    %100 = arith.addf %98, %99 : vector<2x32xf32>
    %101 = arith.negf %100 : vector<2x32xf32>
    %102 = math.exp %101 : vector<2x32xf32>
    %cst_32 = arith.constant 1.000000e+00 : f32
    %103 = vector.broadcast %cst_32 : f32 to vector<2x32xf32>
    %104 = arith.addf %103, %102 : vector<2x32xf32>
    %105 = arith.divf %103, %104 : vector<2x32xf32>
    %106 = vector.extract_strided_slice %95 {offsets = [0, 32], sizes = [2, 32], strides = [1, 1]} : vector<2x96xf32> to vector<2x32xf32>
    %107 = vector.extract_strided_slice %97 {offsets = [0, 32], sizes = [2, 32], strides = [1, 1]} : vector<2x96xf32> to vector<2x32xf32>
    %108 = arith.addf %106, %107 : vector<2x32xf32>
    %109 = arith.negf %108 : vector<2x32xf32>
    %110 = math.exp %109 : vector<2x32xf32>
    %cst_33 = arith.constant 1.000000e+00 : f32
    %111 = vector.broadcast %cst_33 : f32 to vector<2x32xf32>
    %112 = arith.addf %111, %110 : vector<2x32xf32>
    %113 = arith.divf %111, %112 : vector<2x32xf32>
    %114 = vector.extract_strided_slice %95 {offsets = [0, 64], sizes = [2, 32], strides = [1, 1]} : vector<2x96xf32> to vector<2x32xf32>
    %115 = vector.extract_strided_slice %97 {offsets = [0, 64], sizes = [2, 32], strides = [1, 1]} : vector<2x96xf32> to vector<2x32xf32>
    %116 = arith.addf %115, %10 : vector<2x32xf32>
    %117 = arith.mulf %105, %116 : vector<2x32xf32>
    %118 = arith.addf %114, %117 : vector<2x32xf32>
    %119 = math.tanh %118 : vector<2x32xf32>
    %cst_34 = arith.constant 1.000000e+00 : f32
    %120 = vector.broadcast %cst_34 : f32 to vector<2x32xf32>
    %121 = arith.subf %120, %113 : vector<2x32xf32>
    %122 = arith.mulf %121, %119 : vector<2x32xf32>
    %123 = arith.mulf %113, %85 : vector<2x32xf32>
    %124 = arith.addf %122, %123 : vector<2x32xf32>
    %125 = arith.index_cast %c2_i32 : i32 to index
    %c0_35 = arith.constant 0 : index
    %c0_36 = arith.constant 0 : index
    %126 = vector.load %arg7[%125, %c0_35, %c0_36] : memref<8x2x32xf32, #tpu.memory_space<vmem>>, vector<1x2x32xf32>
    %127 = vector.shape_cast %126 : vector<1x2x32xf32> to vector<2x32xf32>
    %128 = vector.shape_cast %124 : vector<2x32xf32> to vector<1x2x32xf32>
    tpu.vector_store %arg7[%125, %c0_35, %c0_36], %128 {strides = array<i32>} : memref<8x2x32xf32, #tpu.memory_space<vmem>>, vector<1x2x32xf32>,
    %c3_i32 = arith.constant 3 : i32
    %129 = arith.index_cast %c3_i32 : i32 to index
    %c0_37 = arith.constant 0 : index
    %c0_38 = arith.constant 0 : index
    %130 = vector.load %arg2[%129, %c0_37, %c0_38] : memref<8x2x32xf32, #tpu.memory_space<vmem>>, vector<1x2x32xf32>
    %131 = vector.shape_cast %130 : vector<1x2x32xf32> to vector<2x32xf32>
    %132 = arith.truncf %131 : vector<2x32xf32> to vector<2x32xbf16>
    %cst_39 = arith.constant dense<0.000000e+00> : vector<2x96xf32>
    %133 = tpu.matmul %132, %3, %cst_39 {dimension_numbers = #tpu.dot_dimension_numbers<[1], [0], [0], [1], [0, 0, 1, 1], [], []>} : vector<2x32xbf16>, vector<32x96xbf16>, vector<2x96xf32> -> vector<2x96xf32>
    %134 = arith.addf %133, %7 : vector<2x96xf32>
    %135 = arith.truncf %124 : vector<2x32xf32> to vector<2x32xbf16>
    %cst_40 = arith.constant dense<0.000000e+00> : vector<2x96xf32>
    %136 = tpu.matmul %135, %4, %cst_40 {dimension_numbers = #tpu.dot_dimension_numbers<[1], [0], [0], [1], [0, 0, 1, 1], [], []>} : vector<2x32xbf16>, vector<32x96xbf16>, vector<2x96xf32> -> vector<2x96xf32>
    %137 = vector.extract_strided_slice %134 {offsets = [0, 0], sizes = [2, 32], strides = [1, 1]} : vector<2x96xf32> to vector<2x32xf32>
    %138 = vector.extract_strided_slice %136 {offsets = [0, 0], sizes = [2, 32], strides = [1, 1]} : vector<2x96xf32> to vector<2x32xf32>
    %139 = arith.addf %137, %138 : vector<2x32xf32>
    %140 = arith.negf %139 : vector<2x32xf32>
    %141 = math.exp %140 : vector<2x32xf32>
    %cst_41 = arith.constant 1.000000e+00 : f32
    %142 = vector.broadcast %cst_41 : f32 to vector<2x32xf32>
    %143 = arith.addf %142, %141 : vector<2x32xf32>
    %144 = arith.divf %142, %143 : vector<2x32xf32>
    %145 = vector.extract_strided_slice %134 {offsets = [0, 32], sizes = [2, 32], strides = [1, 1]} : vector<2x96xf32> to vector<2x32xf32>
    %146 = vector.extract_strided_slice %136 {offsets = [0, 32], sizes = [2, 32], strides = [1, 1]} : vector<2x96xf32> to vector<2x32xf32>
    %147 = arith.addf %145, %146 : vector<2x32xf32>
    %148 = arith.negf %147 : vector<2x32xf32>
    %149 = math.exp %148 : vector<2x32xf32>
    %cst_42 = arith.constant 1.000000e+00 : f32
    %150 = vector.broadcast %cst_42 : f32 to vector<2x32xf32>
    %151 = arith.addf %150, %149 : vector<2x32xf32>
    %152 = arith.divf %150, %151 : vector<2x32xf32>
    %153 = vector.extract_strided_slice %134 {offsets = [0, 64], sizes = [2, 32], strides = [1, 1]} : vector<2x96xf32> to vector<2x32xf32>
    %154 = vector.extract_strided_slice %136 {offsets = [0, 64], sizes = [2, 32], strides = [1, 1]} : vector<2x96xf32> to vector<2x32xf32>
    %155 = arith.addf %154, %10 : vector<2x32xf32>
    %156 = arith.mulf %144, %155 : vector<2x32xf32>
    %157 = arith.addf %153, %156 : vector<2x32xf32>
    %158 = math.tanh %157 : vector<2x32xf32>
    %cst_43 = arith.constant 1.000000e+00 : f32
    %159 = vector.broadcast %cst_43 : f32 to vector<2x32xf32>
    %160 = arith.subf %159, %152 : vector<2x32xf32>
    %161 = arith.mulf %160, %158 : vector<2x32xf32>
    %162 = arith.mulf %152, %124 : vector<2x32xf32>
    %163 = arith.addf %161, %162 : vector<2x32xf32>
    %164 = arith.index_cast %c3_i32 : i32 to index
    %c0_44 = arith.constant 0 : index
    %c0_45 = arith.constant 0 : index
    %165 = vector.load %arg7[%164, %c0_44, %c0_45] : memref<8x2x32xf32, #tpu.memory_space<vmem>>, vector<1x2x32xf32>
    %166 = vector.shape_cast %165 : vector<1x2x32xf32> to vector<2x32xf32>
    %167 = vector.shape_cast %163 : vector<2x32xf32> to vector<1x2x32xf32>
    tpu.vector_store %arg7[%164, %c0_44, %c0_45], %167 {strides = array<i32>} : memref<8x2x32xf32, #tpu.memory_space<vmem>>, vector<1x2x32xf32>,
    %c4_i32 = arith.constant 4 : i32
    %168 = arith.index_cast %c4_i32 : i32 to index
    %c0_46 = arith.constant 0 : index
    %c0_47 = arith.constant 0 : index
    %169 = vector.load %arg2[%168, %c0_46, %c0_47] : memref<8x2x32xf32, #tpu.memory_space<vmem>>, vector<1x2x32xf32>
    %170 = vector.shape_cast %169 : vector<1x2x32xf32> to vector<2x32xf32>
    %171 = arith.truncf %170 : vector<2x32xf32> to vector<2x32xbf16>
    %cst_48 = arith.constant dense<0.000000e+00> : vector<2x96xf32>
    %172 = tpu.matmul %171, %3, %cst_48 {dimension_numbers = #tpu.dot_dimension_numbers<[1], [0], [0], [1], [0, 0, 1, 1], [], []>} : vector<2x32xbf16>, vector<32x96xbf16>, vector<2x96xf32> -> vector<2x96xf32>
    %173 = arith.addf %172, %7 : vector<2x96xf32>
    %174 = arith.truncf %163 : vector<2x32xf32> to vector<2x32xbf16>
    %cst_49 = arith.constant dense<0.000000e+00> : vector<2x96xf32>
    %175 = tpu.matmul %174, %4, %cst_49 {dimension_numbers = #tpu.dot_dimension_numbers<[1], [0], [0], [1], [0, 0, 1, 1], [], []>} : vector<2x32xbf16>, vector<32x96xbf16>, vector<2x96xf32> -> vector<2x96xf32>
    %176 = vector.extract_strided_slice %173 {offsets = [0, 0], sizes = [2, 32], strides = [1, 1]} : vector<2x96xf32> to vector<2x32xf32>
    %177 = vector.extract_strided_slice %175 {offsets = [0, 0], sizes = [2, 32], strides = [1, 1]} : vector<2x96xf32> to vector<2x32xf32>
    %178 = arith.addf %176, %177 : vector<2x32xf32>
    %179 = arith.negf %178 : vector<2x32xf32>
    %180 = math.exp %179 : vector<2x32xf32>
    %cst_50 = arith.constant 1.000000e+00 : f32
    %181 = vector.broadcast %cst_50 : f32 to vector<2x32xf32>
    %182 = arith.addf %181, %180 : vector<2x32xf32>
    %183 = arith.divf %181, %182 : vector<2x32xf32>
    %184 = vector.extract_strided_slice %173 {offsets = [0, 32], sizes = [2, 32], strides = [1, 1]} : vector<2x96xf32> to vector<2x32xf32>
    %185 = vector.extract_strided_slice %175 {offsets = [0, 32], sizes = [2, 32], strides = [1, 1]} : vector<2x96xf32> to vector<2x32xf32>
    %186 = arith.addf %184, %185 : vector<2x32xf32>
    %187 = arith.negf %186 : vector<2x32xf32>
    %188 = math.exp %187 : vector<2x32xf32>
    %cst_51 = arith.constant 1.000000e+00 : f32
    %189 = vector.broadcast %cst_51 : f32 to vector<2x32xf32>
    %190 = arith.addf %189, %188 : vector<2x32xf32>
    %191 = arith.divf %189, %190 : vector<2x32xf32>
    %192 = vector.extract_strided_slice %173 {offsets = [0, 64], sizes = [2, 32], strides = [1, 1]} : vector<2x96xf32> to vector<2x32xf32>
    %193 = vector.extract_strided_slice %175 {offsets = [0, 64], sizes = [2, 32], strides = [1, 1]} : vector<2x96xf32> to vector<2x32xf32>
    %194 = arith.addf %193, %10 : vector<2x32xf32>
    %195 = arith.mulf %183, %194 : vector<2x32xf32>
    %196 = arith.addf %192, %195 : vector<2x32xf32>
    %197 = math.tanh %196 : vector<2x32xf32>
    %cst_52 = arith.constant 1.000000e+00 : f32
    %198 = vector.broadcast %cst_52 : f32 to vector<2x32xf32>
    %199 = arith.subf %198, %191 : vector<2x32xf32>
    %200 = arith.mulf %199, %197 : vector<2x32xf32>
    %201 = arith.mulf %191, %163 : vector<2x32xf32>
    %202 = arith.addf %200, %201 : vector<2x32xf32>
    %203 = arith.index_cast %c4_i32 : i32 to index
    %c0_53 = arith.constant 0 : index
    %c0_54 = arith.constant 0 : index
    %204 = vector.load %arg7[%203, %c0_53, %c0_54] : memref<8x2x32xf32, #tpu.memory_space<vmem>>, vector<1x2x32xf32>
    %205 = vector.shape_cast %204 : vector<1x2x32xf32> to vector<2x32xf32>
    %206 = vector.shape_cast %202 : vector<2x32xf32> to vector<1x2x32xf32>
    tpu.vector_store %arg7[%203, %c0_53, %c0_54], %206 {strides = array<i32>} : memref<8x2x32xf32, #tpu.memory_space<vmem>>, vector<1x2x32xf32>,
    %c5_i32 = arith.constant 5 : i32
    %207 = arith.index_cast %c5_i32 : i32 to index
    %c0_55 = arith.constant 0 : index
    %c0_56 = arith.constant 0 : index
    %208 = vector.load %arg2[%207, %c0_55, %c0_56] : memref<8x2x32xf32, #tpu.memory_space<vmem>>, vector<1x2x32xf32>
    %209 = vector.shape_cast %208 : vector<1x2x32xf32> to vector<2x32xf32>
    %210 = arith.truncf %209 : vector<2x32xf32> to vector<2x32xbf16>
    %cst_57 = arith.constant dense<0.000000e+00> : vector<2x96xf32>
    %211 = tpu.matmul %210, %3, %cst_57 {dimension_numbers = #tpu.dot_dimension_numbers<[1], [0], [0], [1], [0, 0, 1, 1], [], []>} : vector<2x32xbf16>, vector<32x96xbf16>, vector<2x96xf32> -> vector<2x96xf32>
    %212 = arith.addf %211, %7 : vector<2x96xf32>
    %213 = arith.truncf %202 : vector<2x32xf32> to vector<2x32xbf16>
    %cst_58 = arith.constant dense<0.000000e+00> : vector<2x96xf32>
    %214 = tpu.matmul %213, %4, %cst_58 {dimension_numbers = #tpu.dot_dimension_numbers<[1], [0], [0], [1], [0, 0, 1, 1], [], []>} : vector<2x32xbf16>, vector<32x96xbf16>, vector<2x96xf32> -> vector<2x96xf32>
    %215 = vector.extract_strided_slice %212 {offsets = [0, 0], sizes = [2, 32], strides = [1, 1]} : vector<2x96xf32> to vector<2x32xf32>
    %216 = vector.extract_strided_slice %214 {offsets = [0, 0], sizes = [2, 32], strides = [1, 1]} : vector<2x96xf32> to vector<2x32xf32>
    %217 = arith.addf %215, %216 : vector<2x32xf32>
    %218 = arith.negf %217 : vector<2x32xf32>
    %219 = math.exp %218 : vector<2x32xf32>
    %cst_59 = arith.constant 1.000000e+00 : f32
    %220 = vector.broadcast %cst_59 : f32 to vector<2x32xf32>
    %221 = arith.addf %220, %219 : vector<2x32xf32>
    %222 = arith.divf %220, %221 : vector<2x32xf32>
    %223 = vector.extract_strided_slice %212 {offsets = [0, 32], sizes = [2, 32], strides = [1, 1]} : vector<2x96xf32> to vector<2x32xf32>
    %224 = vector.extract_strided_slice %214 {offsets = [0, 32], sizes = [2, 32], strides = [1, 1]} : vector<2x96xf32> to vector<2x32xf32>
    %225 = arith.addf %223, %224 : vector<2x32xf32>
    %226 = arith.negf %225 : vector<2x32xf32>
    %227 = math.exp %226 : vector<2x32xf32>
    %cst_60 = arith.constant 1.000000e+00 : f32
    %228 = vector.broadcast %cst_60 : f32 to vector<2x32xf32>
    %229 = arith.addf %228, %227 : vector<2x32xf32>
    %230 = arith.divf %228, %229 : vector<2x32xf32>
    %231 = vector.extract_strided_slice %212 {offsets = [0, 64], sizes = [2, 32], strides = [1, 1]} : vector<2x96xf32> to vector<2x32xf32>
    %232 = vector.extract_strided_slice %214 {offsets = [0, 64], sizes = [2, 32], strides = [1, 1]} : vector<2x96xf32> to vector<2x32xf32>
    %233 = arith.addf %232, %10 : vector<2x32xf32>
    %234 = arith.mulf %222, %233 : vector<2x32xf32>
    %235 = arith.addf %231, %234 : vector<2x32xf32>
    %236 = math.tanh %235 : vector<2x32xf32>
    %cst_61 = arith.constant 1.000000e+00 : f32
    %237 = vector.broadcast %cst_61 : f32 to vector<2x32xf32>
    %238 = arith.subf %237, %230 : vector<2x32xf32>
    %239 = arith.mulf %238, %236 : vector<2x32xf32>
    %240 = arith.mulf %230, %202 : vector<2x32xf32>
    %241 = arith.addf %239, %240 : vector<2x32xf32>
    %242 = arith.index_cast %c5_i32 : i32 to index
    %c0_62 = arith.constant 0 : index
    %c0_63 = arith.constant 0 : index
    %243 = vector.load %arg7[%242, %c0_62, %c0_63] : memref<8x2x32xf32, #tpu.memory_space<vmem>>, vector<1x2x32xf32>
    %244 = vector.shape_cast %243 : vector<1x2x32xf32> to vector<2x32xf32>
    %245 = vector.shape_cast %241 : vector<2x32xf32> to vector<1x2x32xf32>
    tpu.vector_store %arg7[%242, %c0_62, %c0_63], %245 {strides = array<i32>} : memref<8x2x32xf32, #tpu.memory_space<vmem>>, vector<1x2x32xf32>,
    %c6_i32 = arith.constant 6 : i32
    %246 = arith.index_cast %c6_i32 : i32 to index
    %c0_64 = arith.constant 0 : index
    %c0_65 = arith.constant 0 : index
    %247 = vector.load %arg2[%246, %c0_64, %c0_65] : memref<8x2x32xf32, #tpu.memory_space<vmem>>, vector<1x2x32xf32>
    %248 = vector.shape_cast %247 : vector<1x2x32xf32> to vector<2x32xf32>
    %249 = arith.truncf %248 : vector<2x32xf32> to vector<2x32xbf16>
    %cst_66 = arith.constant dense<0.000000e+00> : vector<2x96xf32>
    %250 = tpu.matmul %249, %3, %cst_66 {dimension_numbers = #tpu.dot_dimension_numbers<[1], [0], [0], [1], [0, 0, 1, 1], [], []>} : vector<2x32xbf16>, vector<32x96xbf16>, vector<2x96xf32> -> vector<2x96xf32>
    %251 = arith.addf %250, %7 : vector<2x96xf32>
    %252 = arith.truncf %241 : vector<2x32xf32> to vector<2x32xbf16>
    %cst_67 = arith.constant dense<0.000000e+00> : vector<2x96xf32>
    %253 = tpu.matmul %252, %4, %cst_67 {dimension_numbers = #tpu.dot_dimension_numbers<[1], [0], [0], [1], [0, 0, 1, 1], [], []>} : vector<2x32xbf16>, vector<32x96xbf16>, vector<2x96xf32> -> vector<2x96xf32>
    %254 = vector.extract_strided_slice %251 {offsets = [0, 0], sizes = [2, 32], strides = [1, 1]} : vector<2x96xf32> to vector<2x32xf32>
    %255 = vector.extract_strided_slice %253 {offsets = [0, 0], sizes = [2, 32], strides = [1, 1]} : vector<2x96xf32> to vector<2x32xf32>
    %256 = arith.addf %254, %255 : vector<2x32xf32>
    %257 = arith.negf %256 : vector<2x32xf32>
    %258 = math.exp %257 : vector<2x32xf32>
    %cst_68 = arith.constant 1.000000e+00 : f32
    %259 = vector.broadcast %cst_68 : f32 to vector<2x32xf32>
    %260 = arith.addf %259, %258 : vector<2x32xf32>
    %261 = arith.divf %259, %260 : vector<2x32xf32>
    %262 = vector.extract_strided_slice %251 {offsets = [0, 32], sizes = [2, 32], strides = [1, 1]} : vector<2x96xf32> to vector<2x32xf32>
    %263 = vector.extract_strided_slice %253 {offsets = [0, 32], sizes = [2, 32], strides = [1, 1]} : vector<2x96xf32> to vector<2x32xf32>
    %264 = arith.addf %262, %263 : vector<2x32xf32>
    %265 = arith.negf %264 : vector<2x32xf32>
    %266 = math.exp %265 : vector<2x32xf32>
    %cst_69 = arith.constant 1.000000e+00 : f32
    %267 = vector.broadcast %cst_69 : f32 to vector<2x32xf32>
    %268 = arith.addf %267, %266 : vector<2x32xf32>
    %269 = arith.divf %267, %268 : vector<2x32xf32>
    %270 = vector.extract_strided_slice %251 {offsets = [0, 64], sizes = [2, 32], strides = [1, 1]} : vector<2x96xf32> to vector<2x32xf32>
    %271 = vector.extract_strided_slice %253 {offsets = [0, 64], sizes = [2, 32], strides = [1, 1]} : vector<2x96xf32> to vector<2x32xf32>
    %272 = arith.addf %271, %10 : vector<2x32xf32>
    %273 = arith.mulf %261, %272 : vector<2x32xf32>
    %274 = arith.addf %270, %273 : vector<2x32xf32>
    %275 = math.tanh %274 : vector<2x32xf32>
    %cst_70 = arith.constant 1.000000e+00 : f32
    %276 = vector.broadcast %cst_70 : f32 to vector<2x32xf32>
    %277 = arith.subf %276, %269 : vector<2x32xf32>
    %278 = arith.mulf %277, %275 : vector<2x32xf32>
    %279 = arith.mulf %269, %241 : vector<2x32xf32>
    %280 = arith.addf %278, %279 : vector<2x32xf32>
    %281 = arith.index_cast %c6_i32 : i32 to index
    %c0_71 = arith.constant 0 : index
    %c0_72 = arith.constant 0 : index
    %282 = vector.load %arg7[%281, %c0_71, %c0_72] : memref<8x2x32xf32, #tpu.memory_space<vmem>>, vector<1x2x32xf32>
    %283 = vector.shape_cast %282 : vector<1x2x32xf32> to vector<2x32xf32>
    %284 = vector.shape_cast %280 : vector<2x32xf32> to vector<1x2x32xf32>
    tpu.vector_store %arg7[%281, %c0_71, %c0_72], %284 {strides = array<i32>} : memref<8x2x32xf32, #tpu.memory_space<vmem>>, vector<1x2x32xf32>,
    %c7_i32 = arith.constant 7 : i32
    %285 = arith.index_cast %c7_i32 : i32 to index
    %c0_73 = arith.constant 0 : index
    %c0_74 = arith.constant 0 : index
    %286 = vector.load %arg2[%285, %c0_73, %c0_74] : memref<8x2x32xf32, #tpu.memory_space<vmem>>, vector<1x2x32xf32>
    %287 = vector.shape_cast %286 : vector<1x2x32xf32> to vector<2x32xf32>
    %288 = arith.truncf %287 : vector<2x32xf32> to vector<2x32xbf16>
    %cst_75 = arith.constant dense<0.000000e+00> : vector<2x96xf32>
    %289 = tpu.matmul %288, %3, %cst_75 {dimension_numbers = #tpu.dot_dimension_numbers<[1], [0], [0], [1], [0, 0, 1, 1], [], []>} : vector<2x32xbf16>, vector<32x96xbf16>, vector<2x96xf32> -> vector<2x96xf32>
    %290 = arith.addf %289, %7 : vector<2x96xf32>
    %291 = arith.truncf %280 : vector<2x32xf32> to vector<2x32xbf16>
    %cst_76 = arith.constant dense<0.000000e+00> : vector<2x96xf32>
    %292 = tpu.matmul %291, %4, %cst_76 {dimension_numbers = #tpu.dot_dimension_numbers<[1], [0], [0], [1], [0, 0, 1, 1], [], []>} : vector<2x32xbf16>, vector<32x96xbf16>, vector<2x96xf32> -> vector<2x96xf32>
    %293 = vector.extract_strided_slice %290 {offsets = [0, 0], sizes = [2, 32], strides = [1, 1]} : vector<2x96xf32> to vector<2x32xf32>
    %294 = vector.extract_strided_slice %292 {offsets = [0, 0], sizes = [2, 32], strides = [1, 1]} : vector<2x96xf32> to vector<2x32xf32>
    %295 = arith.addf %293, %294 : vector<2x32xf32>
    %296 = arith.negf %295 : vector<2x32xf32>
    %297 = math.exp %296 : vector<2x32xf32>
    %cst_77 = arith.constant 1.000000e+00 : f32
    %298 = vector.broadcast %cst_77 : f32 to vector<2x32xf32>
    %299 = arith.addf %298, %297 : vector<2x32xf32>
    %300 = arith.divf %298, %299 : vector<2x32xf32>
    %301 = vector.extract_strided_slice %290 {offsets = [0, 32], sizes = [2, 32], strides = [1, 1]} : vector<2x96xf32> to vector<2x32xf32>
    %302 = vector.extract_strided_slice %292 {offsets = [0, 32], sizes = [2, 32], strides = [1, 1]} : vector<2x96xf32> to vector<2x32xf32>
    %303 = arith.addf %301, %302 : vector<2x32xf32>
    %304 = arith.negf %303 : vector<2x32xf32>
    %305 = math.exp %304 : vector<2x32xf32>
    %cst_78 = arith.constant 1.000000e+00 : f32
    %306 = vector.broadcast %cst_78 : f32 to vector<2x32xf32>
    %307 = arith.addf %306, %305 : vector<2x32xf32>
    %308 = arith.divf %306, %307 : vector<2x32xf32>
    %309 = vector.extract_strided_slice %290 {offsets = [0, 64], sizes = [2, 32], strides = [1, 1]} : vector<2x96xf32> to vector<2x32xf32>
    %310 = vector.extract_strided_slice %292 {offsets = [0, 64], sizes = [2, 32], strides = [1, 1]} : vector<2x96xf32> to vector<2x32xf32>
    %311 = arith.addf %310, %10 : vector<2x32xf32>
    %312 = arith.mulf %300, %311 : vector<2x32xf32>
    %313 = arith.addf %309, %312 : vector<2x32xf32>
    %314 = math.tanh %313 : vector<2x32xf32>
    %cst_79 = arith.constant 1.000000e+00 : f32
    %315 = vector.broadcast %cst_79 : f32 to vector<2x32xf32>
    %316 = arith.subf %315, %308 : vector<2x32xf32>
    %317 = arith.mulf %316, %314 : vector<2x32xf32>
    %318 = arith.mulf %308, %280 : vector<2x32xf32>
    %319 = arith.addf %317, %318 : vector<2x32xf32>
    %320 = arith.index_cast %c7_i32 : i32 to index
    %c0_80 = arith.constant 0 : index
    %c0_81 = arith.constant 0 : index
    %321 = vector.load %arg7[%320, %c0_80, %c0_81] : memref<8x2x32xf32, #tpu.memory_space<vmem>>, vector<1x2x32xf32>
    %322 = vector.shape_cast %321 : vector<1x2x32xf32> to vector<2x32xf32>
    %323 = vector.shape_cast %319 : vector<2x32xf32> to vector<1x2x32xf32>
    tpu.vector_store %arg7[%320, %c0_80, %c0_81], %323 {strides = array<i32>} : memref<8x2x32xf32, #tpu.memory_space<vmem>>, vector<1x2x32xf32>,
    %c8_i32 = arith.constant 8 : i32
    %c0_82 = arith.constant 0 : index
    %c0_83 = arith.constant 0 : index
    %324 = vector.load %arg8[%c0_82, %c0_83] : memref<2x32xf32, #tpu.memory_space<vmem>>, vector<2x32xf32>
    tpu.vector_store %arg8[%c0_82, %c0_83], %319 {strides = array<i32>} : memref<2x32xf32, #tpu.memory_space<vmem>>, vector<2x32xf32>,
    return
  }
  func.func @transform_0(%arg0: i32, %arg1: i32) -> (i32, i32, i32) {
    %c0_i32 = arith.constant 0 : i32
    %c0_i32_0 = arith.constant 0 : i32
    return %arg1, %arg0, %c0_i32 : i32, i32, i32
  }
  func.func @transform_1(%arg0: i32, %arg1: i32) -> (i32, i32) {
    %c0_i32 = arith.constant 0 : i32
    %c0_i32_0 = arith.constant 0 : i32
    %c0_i32_1 = arith.constant 0 : i32
    return %c0_i32, %c0_i32_0 : i32, i32
  }
  func.func @transform_2(%arg0: i32, %arg1: i32) -> (i32, i32) {
    %c0_i32 = arith.constant 0 : i32
    %c0_i32_0 = arith.constant 0 : i32
    %c0_i32_1 = arith.constant 0 : i32
    return %c0_i32, %c0_i32_0 : i32, i32
  }
  func.func @transform_3(%arg0: i32, %arg1: i32) -> (i32, i32) {
    %c0_i32 = arith.constant 0 : i32
    %c0_i32_0 = arith.constant 0 : i32
    %c0_i32_1 = arith.constant 0 : i32
    return %c0_i32, %c0_i32_0 : i32, i32
  }
  func.func @transform_4(%arg0: i32, %arg1: i32) -> (i32, i32) {
    %c0_i32 = arith.constant 0 : i32
    %c0_i32_0 = arith.constant 0 : i32
    %c0_i32_1 = arith.constant 0 : i32
    return %c0_i32, %c0_i32_0 : i32, i32
  }
  func.func @transform_5(%arg0: i32, %arg1: i32) -> (i32, i32, i32) {
    %c0_i32 = arith.constant 0 : i32
    %c0_i32_0 = arith.constant 0 : i32
    return %arg1, %arg0, %c0_i32 : i32, i32, i32
  }
}

</mosaic_0001>

<llo_original>
// kernel: seq2seq_encoder_forward.2
$region0: #{seq2seq_encoder_forward.2}
  #allocation0 [shape = 'u32[]', space=smem, size = 0x4, offset = 0x4, fixed_abs, tag = 'smem constant byte address 0x4 - core index']
  #allocation1 [shape = 'u32[144,128]{1,0:T(1,128)}', space=vmem, size = 0x12000, scoped, tag = 'internal scratch']
  #allocation2 [shape = 'f32[2,32]{1,0:T(2,128)}', space=vmem, size = 0x400, scoped, tag = 'scratch operand']
  %s0 = inlined_call_operand.vmem [shape: f32[8,2,32], index: 0, kind: input, shape index: {}]
  %s1 = inlined_call_operand.vmem [shape: bf16[32,96], index: 1, kind: input, shape index: {}]
  %s2 = inlined_call_operand.vmem [shape: bf16[32,96], index: 2, kind: input, shape index: {}]
  %s3 = inlined_call_operand.vmem [shape: f32[1,96], index: 3, kind: input, shape index: {}]
  %s4 = inlined_call_operand.vmem [shape: f32[1,32], index: 4, kind: input, shape index: {}]
  %s5 = inlined_call_operand.vmem [shape: f32[8,2,32], index: 5, kind: output, shape index: {}]
  %s6 = sld [smem:[#allocation0]]
  $region34: #{seq2seq_encoder_forward.2} parent=0
    _
  %s8 = ssub.s32 1, %s6
  %s9 = scalar_select 0, %s8, %s6
  // Predicated region
  $region2: #{seq2seq_encoder_forward.2} parent=0 // pred_check
    _
  $region3: #{seq2seq_encoder_forward.2} parent=0 // pred_check_branch
    %11 = sbr.rel (0) target = $region5
  $region4: #{seq2seq_encoder_forward.2} parent=0 // pred_region
    _
  $region5: #{seq2seq_encoder_forward.2} parent=0 // pred_fallthru
    _
  // Predicated region
  $region6: #{seq2seq_encoder_forward.2} parent=0 // pred_check
    _
  $region7: #{seq2seq_encoder_forward.2} parent=0 // pred_check_branch
    %13 = sbr.rel (0) target = $region9
  $region8: #{seq2seq_encoder_forward.2} parent=0 // pred_region
    _
  $region9: #{seq2seq_encoder_forward.2} parent=0 // pred_fallthru
    _
  // Predicated region
  $region10: #{seq2seq_encoder_forward.2} parent=0 // pred_check
    _
  $region11: #{seq2seq_encoder_forward.2} parent=0 // pred_check_branch
    %15 = sbr.rel (0) target = $region13
  $region12: #{seq2seq_encoder_forward.2} parent=0 // pred_region
    _
  $region13: #{seq2seq_encoder_forward.2} parent=0 // pred_fallthru
    _
  // Predicated region
  $region14: #{seq2seq_encoder_forward.2} parent=0 // pred_check
    _
  $region15: #{seq2seq_encoder_forward.2} parent=0 // pred_check_branch
    %17 = sbr.rel (0) target = $region17
  $region16: #{seq2seq_encoder_forward.2} parent=0 // pred_region
    _
  $region17: #{seq2seq_encoder_forward.2} parent=0 // pred_fallthru
    _
  // Predicated region
  $region18: #{seq2seq_encoder_forward.2} parent=0 // pred_check
    _
  $region19: #{seq2seq_encoder_forward.2} parent=0 // pred_check_branch
    %19 = sbr.rel (0) target = $region21
  $region20: #{seq2seq_encoder_forward.2} parent=0 // pred_region
    _
  $region21: #{seq2seq_encoder_forward.2} parent=0 // pred_fallthru
    _
  %p21 = scmp.eq.s32.totalorder 0, 0
  // Predicated region
  $region22: #{seq2seq_encoder_forward.2} parent=0 // pred_check
    %p22 = pneg %p21
  $region23: #{seq2seq_encoder_forward.2} parent=0 // pred_check_branch
    %24 = sbr.rel (%p22) target = $region25
  $region24: #{seq2seq_encoder_forward.2} parent=0 // pred_region
    %vm25 = vcmask 254976
    %26 = vst.msk [vmem:[#allocation2] sm:$0x3] %vm25, 0.0
  $region25: #{seq2seq_encoder_forward.2} parent=0 // pred_fallthru
    _
  %v27 = vld [vmem:[%s1] sm:$0xf]
  %v28 = vld [vmem:[%s1 + $0x4] sm:$0xf]
  %v29 = vld [vmem:[%s1 + $0x8] sm:$0xf]
  %v30 = vld [vmem:[%s1 + $0xc] sm:$0xf]
  %v31 = vld [vmem:[%s2] sm:$0xf]
  %v32 = vld [vmem:[%s2 + $0x4] sm:$0xf]
  %v33 = vld [vmem:[%s2 + $0x8] sm:$0xf]
  %v34 = vld [vmem:[%s2 + $0xc] sm:$0xf]
  %v35 = vld [vmem:[%s3] sm:$0x1]
  %v37 = vlaneseq
  %v38 = vshrl.u32 %v37, 7
  %v39 = vsub.s32 0, %v38
  %v40 = vrot.slane %v35, %v39
  %v42 = vld [vmem:[%s4] sm:$0x1]
  %v44 = vlaneseq
  %v45 = vshrl.u32 %v44, 7
  %v46 = vsub.s32 0, %v45
  %v47 = vrot.slane %v42, %v46
  %v48 = vld [vmem:[#allocation2] sm:$0x3]
  %v49 = vld [vmem:[%s0] sm:$0x3]
  %v50 = vpack.c.bf16 %v49, %v49
  %v55 = vunpack.c.l.b16 %v27
  %v56 = vunpack.c.l.b16 %v28
  %v57 = vunpack.c.l.b16 %v29
  %v58 = vunpack.c.l.b16 %v30
  %v59 = vpack.c.b16 %v56, %v55
  %v60 = vpack.c.b16 %v58, %v57
  %vm63 = vcmask 261120
  %v65 = vsel %vm63, %v50, 0
  %67 = vmatprep.subr.bf16.mxu0 0
  %68 = vmatpush1.bf16.msra.mxu0 0
  %69 = vmatprep.subr.bf16.mxu0 0
  %70 = vmatpush1.bf16.msra.mxu0 0
  %71 = vmatprep.subr.bf16.mxu0 0
  %72 = vmatpush1.bf16.msra.mxu0 0
  %73 = vmatprep.subr.bf16.mxu0 0
  %74 = vmatpush1.bf16.msra.mxu0 0
  %75 = vmatprep.subr.bf16.mxu0 0
  %76 = vmatpush1.bf16.msra.mxu0 0
  %77 = vmatprep.subr.bf16.mxu0 0
  %78 = vmatpush1.bf16.msra.mxu0 0
  %79 = vmatprep.subr.bf16.mxu0 0
  %80 = vmatpush1.bf16.msra.mxu0 %v60
  %81 = vmatprep.subr.bf16.mxu0 0
  %82 = vmatpush1.bf16.msra.mxu0 %v59
  %83 = vmatprep.subr.bf16.mxu0 0
  %84 = vmatpush2.bf16.msra.mxu0 0
  %85 = vmatprep.subr.bf16.mxu0 0
  %86 = vmatpush2.bf16.msra.mxu0 0
  %87 = vmatprep.subr.bf16.mxu0 0
  %88 = vmatpush2.bf16.msra.mxu0 0
  %89 = vmatprep.subr.bf16.mxu0 0
  %90 = vmatpush2.bf16.msra.mxu0 0
  %91 = vmatprep.subr.bf16.mxu0 0
  %92 = vmatpush2.bf16.msra.mxu0 0
  %93 = vmatprep.subr.bf16.mxu0 0
  %94 = vmatpush2.bf16.msra.mxu0 0
  %95 = vmatprep.subr.bf16.mxu0 0
  %96 = vmatpush2.bf16.msra.mxu0 0
  %97 = vmatprep.subr.bf16.mxu0 0
  %98 = vmatpush2.bf16.msra.mxu0 0
  %99 = vmatprep.mubr.bf16.mxu0 0
  %100 = vmatmul.mubr.bf16.gmra.mxu0 %v65
  %v101 = vpop.f32.mrf.mxu0
  %v102 = vadd.f32 %v40, %v101
  %v103 = vpop.f32.mrf.mxu0
  %v104 = vpop.f32.mrf.mxu0
  %v105 = vpop.f32.mrf.mxu0
  %106 = vdwg.mxu0
  %v107 = vpack.c.bf16 %v48, %v48
  %v112 = vunpack.c.l.b16 %v31
  %v113 = vunpack.c.l.b16 %v32
  %v114 = vunpack.c.l.b16 %v33
  %v115 = vunpack.c.l.b16 %v34
  %v116 = vpack.c.b16 %v113, %v112
  %v117 = vpack.c.b16 %v115, %v114
  %v121 = vsel %vm63, %v107, 0
  %123 = vmatprep.subr.bf16.mxu0 0
  %124 = vmatpush1.bf16.msra.mxu0 0
  %125 = vmatprep.subr.bf16.mxu0 0
  %126 = vmatpush1.bf16.msra.mxu0 0
  %127 = vmatprep.subr.bf16.mxu0 0
  %128 = vmatpush1.bf16.msra.mxu0 0
  %129 = vmatprep.subr.bf16.mxu0 0
  %130 = vmatpush1.bf16.msra.mxu0 0
  %131 = vmatprep.subr.bf16.mxu0 0
  %132 = vmatpush1.bf16.msra.mxu0 0
  %133 = vmatprep.subr.bf16.mxu0 0
  %134 = vmatpush1.bf16.msra.mxu0 0
  %135 = vmatprep.subr.bf16.mxu0 0
  %136 = vmatpush1.bf16.msra.mxu0 %v117
  %137 = vmatprep.subr.bf16.mxu0 0
  %138 = vmatpush1.bf16.msra.mxu0 %v116
  %139 = vmatprep.subr.bf16.mxu0 0
  %140 = vmatpush2.bf16.msra.mxu0 0
  %141 = vmatprep.subr.bf16.mxu0 0
  %142 = vmatpush2.bf16.msra.mxu0 0
  %143 = vmatprep.subr.bf16.mxu0 0
  %144 = vmatpush2.bf16.msra.mxu0 0
  %145 = vmatprep.subr.bf16.mxu0 0
  %146 = vmatpush2.bf16.msra.mxu0 0
  %147 = vmatprep.subr.bf16.mxu0 0
  %148 = vmatpush2.bf16.msra.mxu0 0
  %149 = vmatprep.subr.bf16.mxu0 0
  %150 = vmatpush2.bf16.msra.mxu0 0
  %151 = vmatprep.subr.bf16.mxu0 0
  %152 = vmatpush2.bf16.msra.mxu0 0
  %153 = vmatprep.subr.bf16.mxu0 0
  %154 = vmatpush2.bf16.msra.mxu0 0
  %155 = vmatprep.mubr.bf16.mxu0 0
  %156 = vmatmul.mubr.bf16.gmra.mxu0 %v121
  %v157 = vpop.f32.mrf.mxu0
  %v158 = vadd.f32 0.0, %v157
  %v159 = vpop.f32.mrf.mxu0
  %v160 = vpop.f32.mrf.mxu0
  %v161 = vpop.f32.mrf.mxu0
  %162 = vdwg.mxu0
  %v163 = vadd.f32 %v102, %v158
  %v164 = vxor.u32 %v163, 2147483648
  %v165 = vmul.f32 %v164, 1.442695
  %v166 = vpow.pop %v165
  %v167 = vadd.f32 %v166, 1.0
  %v168 = vrcp.pop %v167
  %v169 = vmul.f32 1.0, %v168
  %170 = vrot.lane.b32.xlu0 %v47, 64
  %v171 = vpop.permute.xlu0 %170
  %v173 = vadd.f32 %v158, %v171
  %175 = vrot.lane.b32.xlu0 %v173, 64
  %v176 = vpop.permute.xlu0 %175
  %v178 = vmul.f32 %v169, %v176
  %180 = vrot.lane.b32.xlu0 %v178, 64
  %v181 = vpop.permute.xlu0 %180
  %v183 = vadd.f32 %v102, %v181
  %v184 = vtanh.pop %v183
  %v185 = vsub.f32 1.0, %v169
  %187 = vrot.lane.b32.xlu0 %v184, 96
  %v188 = vpop.permute.xlu0 %187
  %v190 = vmul.f32 %v185, %v188
  %192 = vrot.lane.b32.xlu0 %v48, 32
  %v193 = vpop.permute.xlu0 %192
  %v195 = vmul.f32 %v169, %v193
  %v196 = vadd.f32 %v190, %v195
  %198 = vrot.lane.b32.xlu0 %v196, 96
  %v199 = vpop.permute.xlu0 %198
  %vm201 = vcmask 254976
  %202 = vst.msk [vmem:[%s5] sm:$0x3] %vm201, %v199
  %s203 = scalar_lea.vmem %s0, 2
  %v204 = vld [vmem:[%s203] sm:$0x3]
  %v205 = vpack.c.bf16 %v204, %v204
  %v207 = vsel %vm63, %v205, 0
  %209 = vmatprep.subr.bf16.mxu0 0
  %210 = vmatpush1.bf16.msra.mxu0 0
  %211 = vmatprep.subr.bf16.mxu0 0
  %212 = vmatpush1.bf16.msra.mxu0 0
  %213 = vmatprep.subr.bf16.mxu0 0
  %214 = vmatpush1.bf16.msra.mxu0 0
  %215 = vmatprep.subr.bf16.mxu0 0
  %216 = vmatpush1.bf16.msra.mxu0 0
  %217 = vmatprep.subr.bf16.mxu0 0
  %218 = vmatpush1.bf16.msra.mxu0 0
  %219 = vmatprep.subr.bf16.mxu0 0
  %220 = vmatpush1.bf16.msra.mxu0 0
  %221 = vmatprep.subr.bf16.mxu0 0
  %222 = vmatpush1.bf16.msra.mxu0 %v60
  %223 = vmatprep.subr.bf16.mxu0 0
  %224 = vmatpush1.bf16.msra.mxu0 %v59
  %225 = vmatprep.subr.bf16.mxu0 0
  %226 = vmatpush2.bf16.msra.mxu0 0
  %227 = vmatprep.subr.bf16.mxu0 0
  %228 = vmatpush2.bf16.msra.mxu0 0
  %229 = vmatprep.subr.bf16.mxu0 0
  %230 = vmatpush2.bf16.msra.mxu0 0
  %231 = vmatprep.subr.bf16.mxu0 0
  %232 = vmatpush2.bf16.msra.mxu0 0
  %233 = vmatprep.subr.bf16.mxu0 0
  %234 = vmatpush2.bf16.msra.mxu0 0
  %235 = vmatprep.subr.bf16.mxu0 0
  %236 = vmatpush2.bf16.msra.mxu0 0
  %237 = vmatprep.subr.bf16.mxu0 0
  %238 = vmatpush2.bf16.msra.mxu0 0
  %239 = vmatprep.subr.bf16.mxu0 0
  %240 = vmatpush2.bf16.msra.mxu0 0
  %241 = vmatprep.mubr.bf16.mxu0 0
  %242 = vmatmul.mubr.bf16.gmra.mxu0 %v207
  %v243 = vpop.f32.mrf.mxu0
  %v244 = vadd.f32 %v40, %v243
  %v245 = vpop.f32.mrf.mxu0
  %v246 = vpop.f32.mrf.mxu0
  %v247 = vpop.f32.mrf.mxu0
  %248 = vdwg.mxu0
  %v249 = vpack.c.bf16 %v196, %v196
  %251 = vrot.lane.b32.xlu0 %v249, 96
  %v252 = vpop.permute.xlu0 %251
  %v254 = vsel %vm63, %v252, 0
  %256 = vmatprep.subr.bf16.mxu0 0
  %257 = vmatpush1.bf16.msra.mxu0 0
  %258 = vmatprep.subr.bf16.mxu0 0
  %259 = vmatpush1.bf16.msra.mxu0 0
  %260 = vmatprep.subr.bf16.mxu0 0
  %261 = vmatpush1.bf16.msra.mxu0 0
  %262 = vmatprep.subr.bf16.mxu0 0
  %263 = vmatpush1.bf16.msra.mxu0 0
  %264 = vmatprep.subr.bf16.mxu0 0
  %265 = vmatpush1.bf16.msra.mxu0 0
  %266 = vmatprep.subr.bf16.mxu0 0
  %267 = vmatpush1.bf16.msra.mxu0 0
  %268 = vmatprep.subr.bf16.mxu0 0
  %269 = vmatpush1.bf16.msra.mxu0 %v117
  %270 = vmatprep.subr.bf16.mxu0 0
  %271 = vmatpush1.bf16.msra.mxu0 %v116
  %272 = vmatprep.subr.bf16.mxu0 0
  %273 = vmatpush2.bf16.msra.mxu0 0
  %274 = vmatprep.subr.bf16.mxu0 0
  %275 = vmatpush2.bf16.msra.mxu0 0
  %276 = vmatprep.subr.bf16.mxu0 0
  %277 = vmatpush2.bf16.msra.mxu0 0
  %278 = vmatprep.subr.bf16.mxu0 0
  %279 = vmatpush2.bf16.msra.mxu0 0
  %280 = vmatprep.subr.bf16.mxu0 0
  %281 = vmatpush2.bf16.msra.mxu0 0
  %282 = vmatprep.subr.bf16.mxu0 0
  %283 = vmatpush2.bf16.msra.mxu0 0
  %284 = vmatprep.subr.bf16.mxu0 0
  %285 = vmatpush2.bf16.msra.mxu0 0
  %286 = vmatprep.subr.bf16.mxu0 0
  %287 = vmatpush2.bf16.msra.mxu0 0
  %288 = vmatprep.mubr.bf16.mxu0 0
  %289 = vmatmul.mubr.bf16.gmra.mxu0 %v254
  %v290 = vpop.f32.mrf.mxu0
  %v291 = vadd.f32 0.0, %v290
  %v292 = vpop.f32.mrf.mxu0
  %v293 = vpop.f32.mrf.mxu0
  %v294 = vpop.f32.mrf.mxu0
  %295 = vdwg.mxu0
  %v296 = vadd.f32 %v244, %v291
  %v297 = vxor.u32 %v296, 2147483648
  %v298 = vmul.f32 %v297, 1.442695
  %v299 = vpow.pop %v298
  %v300 = vadd.f32 %v299, 1.0
  %v301 = vrcp.pop %v300
  %v302 = vmul.f32 1.0, %v301
  %v303 = vadd.f32 %v291, %v171
  %305 = vrot.lane.b32.xlu0 %v303, 64
  %v306 = vpop.permute.xlu0 %305
  %v308 = vmul.f32 %v302, %v306
  %310 = vrot.lane.b32.xlu0 %v308, 64
  %v311 = vpop.permute.xlu0 %310
  %v313 = vadd.f32 %v244, %v311
  %v314 = vtanh.pop %v313
  %v315 = vsub.f32 1.0, %v302
  %317 = vrot.lane.b32.xlu0 %v314, 96
  %v318 = vpop.permute.xlu0 %317
  %v320 = vmul.f32 %v315, %v318
  %v321 = vmul.f32 %v302, %v196
  %v322 = vadd.f32 %v320, %v321
  %324 = vrot.lane.b32.xlu0 %v322, 96
  %v325 = vpop.permute.xlu0 %324
  %s327 = scalar_lea.vmem %s5, 2
  %328 = vst.msk [vmem:[%s327] sm:$0x3] %vm201, %v325
  %s329 = scalar_lea.vmem %s0, 4
  %v330 = vld [vmem:[%s329] sm:$0x3]
  %v331 = vpack.c.bf16 %v330, %v330
  %v333 = vsel %vm63, %v331, 0
  %335 = vmatprep.subr.bf16.mxu0 0
  %336 = vmatpush1.bf16.msra.mxu0 0
  %337 = vmatprep.subr.bf16.mxu0 0
  %338 = vmatpush1.bf16.msra.mxu0 0
  %339 = vmatprep.subr.bf16.mxu0 0
  %340 = vmatpush1.bf16.msra.mxu0 0
  %341 = vmatprep.subr.bf16.mxu0 0
  %342 = vmatpush1.bf16.msra.mxu0 0
  %343 = vmatprep.subr.bf16.mxu0 0
  %344 = vmatpush1.bf16.msra.mxu0 0
  %345 = vmatprep.subr.bf16.mxu0 0
  %346 = vmatpush1.bf16.msra.mxu0 0
  %347 = vmatprep.subr.bf16.mxu0 0
  %348 = vmatpush1.bf16.msra.mxu0 %v60
  %349 = vmatprep.subr.bf16.mxu0 0
  %350 = vmatpush1.bf16.msra.mxu0 %v59
  %351 = vmatprep.subr.bf16.mxu0 0
  %352 = vmatpush2.bf16.msra.mxu0 0
  %353 = vmatprep.subr.bf16.mxu0 0
  %354 = vmatpush2.bf16.msra.mxu0 0
  %355 = vmatprep.subr.bf16.mxu0 0
  %356 = vmatpush2.bf16.msra.mxu0 0
  %357 = vmatprep.subr.bf16.mxu0 0
  %358 = vmatpush2.bf16.msra.mxu0 0
  %359 = vmatprep.subr.bf16.mxu0 0
  %360 = vmatpush2.bf16.msra.mxu0 0
  %361 = vmatprep.subr.bf16.mxu0 0
  %362 = vmatpush2.bf16.msra.mxu0 0
  %363 = vmatprep.subr.bf16.mxu0 0
  %364 = vmatpush2.bf16.msra.mxu0 0
  %365 = vmatprep.subr.bf16.mxu0 0
  %366 = vmatpush2.bf16.msra.mxu0 0
  %367 = vmatprep.mubr.bf16.mxu0 0
  %368 = vmatmul.mubr.bf16.gmra.mxu0 %v333
  %v369 = vpop.f32.mrf.mxu0
  %v370 = vadd.f32 %v40, %v369
  %v371 = vpop.f32.mrf.mxu0
  %v372 = vpop.f32.mrf.mxu0
  %v373 = vpop.f32.mrf.mxu0
  %374 = vdwg.mxu0
  %v375 = vpack.c.bf16 %v322, %v322
  %377 = vrot.lane.b32.xlu0 %v375, 96
  %v378 = vpop.permute.xlu0 %377
  %v380 = vsel %vm63, %v378, 0
  %382 = vmatprep.subr.bf16.mxu0 0
  %383 = vmatpush1.bf16.msra.mxu0 0
  %384 = vmatprep.subr.bf16.mxu0 0
  %385 = vmatpush1.bf16.msra.mxu0 0
  %386 = vmatprep.subr.bf16.mxu0 0
  %387 = vmatpush1.bf16.msra.mxu0 0
  %388 = vmatprep.subr.bf16.mxu0 0
  %389 = vmatpush1.bf16.msra.mxu0 0
  %390 = vmatprep.subr.bf16.mxu0 0
  %391 = vmatpush1.bf16.msra.mxu0 0
  %392 = vmatprep.subr.bf16.mxu0 0
  %393 = vmatpush1.bf16.msra.mxu0 0
  %394 = vmatprep.subr.bf16.mxu0 0
  %395 = vmatpush1.bf16.msra.mxu0 %v117
  %396 = vmatprep.subr.bf16.mxu0 0
  %397 = vmatpush1.bf16.msra.mxu0 %v116
  %398 = vmatprep.subr.bf16.mxu0 0
  %399 = vmatpush2.bf16.msra.mxu0 0
  %400 = vmatprep.subr.bf16.mxu0 0
  %401 = vmatpush2.bf16.msra.mxu0 0
  %402 = vmatprep.subr.bf16.mxu0 0
  %403 = vmatpush2.bf16.msra.mxu0 0
  %404 = vmatprep.subr.bf16.mxu0 0
  %405 = vmatpush2.bf16.msra.mxu0 0
  %406 = vmatprep.subr.bf16.mxu0 0
  %407 = vmatpush2.bf16.msra.mxu0 0
  %408 = vmatprep.subr.bf16.mxu0 0
  %409 = vmatpush2.bf16.msra.mxu0 0
  %410 = vmatprep.subr.bf16.mxu0 0
  %411 = vmatpush2.bf16.msra.mxu0 0
  %412 = vmatprep.subr.bf16.mxu0 0
  %413 = vmatpush2.bf16.msra.mxu0 0
  %414 = vmatprep.mubr.bf16.mxu0 0
  %415 = vmatmul.mubr.bf16.gmra.mxu0 %v380
  %v416 = vpop.f32.mrf.mxu0
  %v417 = vadd.f32 0.0, %v416
  %v418 = vpop.f32.mrf.mxu0
  %v419 = vpop.f32.mrf.mxu0
  %v420 = vpop.f32.mrf.mxu0
  %421 = vdwg.mxu0
  %v422 = vadd.f32 %v370, %v417
  %v423 = vxor.u32 %v422, 2147483648
  %v424 = vmul.f32 %v423, 1.442695
  %v425 = vpow.pop %v424
  %v426 = vadd.f32 %v425, 1.0
  %v427 = vrcp.pop %v426
  %v428 = vmul.f32 1.0, %v427
  %v429 = vadd.f32 %v417, %v171
  %431 = vrot.lane.b32.xlu0 %v429, 64
  %v432 = vpop.permute.xlu0 %431
  %v434 = vmul.f32 %v428, %v432
  %436 = vrot.lane.b32.xlu0 %v434, 64
  %v437 = vpop.permute.xlu0 %436
  %v439 = vadd.f32 %v370, %v437
  %v440 = vtanh.pop %v439
  %v441 = vsub.f32 1.0, %v428
  %443 = vrot.lane.b32.xlu0 %v440, 96
  %v444 = vpop.permute.xlu0 %443
  %v446 = vmul.f32 %v441, %v444
  %v447 = vmul.f32 %v428, %v322
  %v448 = vadd.f32 %v446, %v447
  %450 = vrot.lane.b32.xlu0 %v448, 96
  %v451 = vpop.permute.xlu0 %450
  %s453 = scalar_lea.vmem %s5, 4
  %454 = vst.msk [vmem:[%s453] sm:$0x3] %vm201, %v451
  %s455 = scalar_lea.vmem %s0, 6
  %v456 = vld [vmem:[%s455] sm:$0x3]
  %v457 = vpack.c.bf16 %v456, %v456
  %v459 = vsel %vm63, %v457, 0
  %461 = vmatprep.subr.bf16.mxu0 0
  %462 = vmatpush1.bf16.msra.mxu0 0
  %463 = vmatprep.subr.bf16.mxu0 0
  %464 = vmatpush1.bf16.msra.mxu0 0
  %465 = vmatprep.subr.bf16.mxu0 0
  %466 = vmatpush1.bf16.msra.mxu0 0
  %467 = vmatprep.subr.bf16.mxu0 0
  %468 = vmatpush1.bf16.msra.mxu0 0
  %469 = vmatprep.subr.bf16.mxu0 0
  %470 = vmatpush1.bf16.msra.mxu0 0
  %471 = vmatprep.subr.bf16.mxu0 0
  %472 = vmatpush1.bf16.msra.mxu0 0
  %473 = vmatprep.subr.bf16.mxu0 0
  %474 = vmatpush1.bf16.msra.mxu0 %v60
  %475 = vmatprep.subr.bf16.mxu0 0
  %476 = vmatpush1.bf16.msra.mxu0 %v59
  %477 = vmatprep.subr.bf16.mxu0 0
  %478 = vmatpush2.bf16.msra.mxu0 0
  %479 = vmatprep.subr.bf16.mxu0 0
  %480 = vmatpush2.bf16.msra.mxu0 0
  %481 = vmatprep.subr.bf16.mxu0 0
  %482 = vmatpush2.bf16.msra.mxu0 0
  %483 = vmatprep.subr.bf16.mxu0 0
  %484 = vmatpush2.bf16.msra.mxu0 0
  %485 = vmatprep.subr.bf16.mxu0 0
  %486 = vmatpush2.bf16.msra.mxu0 0
  %487 = vmatprep.subr.bf16.mxu0 0
  %488 = vmatpush2.bf16.msra.mxu0 0
  %489 = vmatprep.subr.bf16.mxu0 0
  %490 = vmatpush2.bf16.msra.mxu0 0
  %491 = vmatprep.subr.bf16.mxu0 0
  %492 = vmatpush2.bf16.msra.mxu0 0
  %493 = vmatprep.mubr.bf16.mxu0 0
  %494 = vmatmul.mubr.bf16.gmra.mxu0 %v459
  %v495 = vpop.f32.mrf.mxu0
  %v496 = vadd.f32 %v40, %v495
  %v497 = vpop.f32.mrf.mxu0
  %v498 = vpop.f32.mrf.mxu0
  %v499 = vpop.f32.mrf.mxu0
  %500 = vdwg.mxu0
  %v501 = vpack.c.bf16 %v448, %v448
  %503 = vrot.lane.b32.xlu0 %v501, 96
  %v504 = vpop.permute.xlu0 %503
  %v506 = vsel %vm63, %v504, 0
  %508 = vmatprep.subr.bf16.mxu0 0
  %509 = vmatpush1.bf16.msra.mxu0 0
  %510 = vmatprep.subr.bf16.mxu0 0
  %511 = vmatpush1.bf16.msra.mxu0 0
  %512 = vmatprep.subr.bf16.mxu0 0
  %513 = vmatpush1.bf16.msra.mxu0 0
  %514 = vmatprep.subr.bf16.mxu0 0
  %515 = vmatpush1.bf16.msra.mxu0 0
  %516 = vmatprep.subr.bf16.mxu0 0
  %517 = vmatpush1.bf16.msra.mxu0 0
  %518 = vmatprep.subr.bf16.mxu0 0
  %519 = vmatpush1.bf16.msra.mxu0 0
  %520 = vmatprep.subr.bf16.mxu0 0
  %521 = vmatpush1.bf16.msra.mxu0 %v117
  %522 = vmatprep.subr.bf16.mxu0 0
  %523 = vmatpush1.bf16.msra.mxu0 %v116
  %524 = vmatprep.subr.bf16.mxu0 0
  %525 = vmatpush2.bf16.msra.mxu0 0
  %526 = vmatprep.subr.bf16.mxu0 0
  %527 = vmatpush2.bf16.msra.mxu0 0
  %528 = vmatprep.subr.bf16.mxu0 0
  %529 = vmatpush2.bf16.msra.mxu0 0
  %530 = vmatprep.subr.bf16.mxu0 0
  %531 = vmatpush2.bf16.msra.mxu0 0
  %532 = vmatprep.subr.bf16.mxu0 0
  %533 = vmatpush2.bf16.msra.mxu0 0
  %534 = vmatprep.subr.bf16.mxu0 0
  %535 = vmatpush2.bf16.msra.mxu0 0
  %536 = vmatprep.subr.bf16.mxu0 0
  %537 = vmatpush2.bf16.msra.mxu0 0
  %538 = vmatprep.subr.bf16.mxu0 0
  %539 = vmatpush2.bf16.msra.mxu0 0
  %540 = vmatprep.mubr.bf16.mxu0 0
  %541 = vmatmul.mubr.bf16.gmra.mxu0 %v506
  %v542 = vpop.f32.mrf.mxu0
  %v543 = vadd.f32 0.0, %v542
  %v544 = vpop.f32.mrf.mxu0
  %v545 = vpop.f32.mrf.mxu0
  %v546 = vpop.f32.mrf.mxu0
  %547 = vdwg.mxu0
  %v548 = vadd.f32 %v496, %v543
  %v549 = vxor.u32 %v548, 2147483648
  %v550 = vmul.f32 %v549, 1.442695
  %v551 = vpow.pop %v550
  %v552 = vadd.f32 %v551, 1.0
  %v553 = vrcp.pop %v552
  %v554 = vmul.f32 1.0, %v553
  %v555 = vadd.f32 %v543, %v171
  %557 = vrot.lane.b32.xlu0 %v555, 64
  %v558 = vpop.permute.xlu0 %557
  %v560 = vmul.f32 %v554, %v558
  %562 = vrot.lane.b32.xlu0 %v560, 64
  %v563 = vpop.permute.xlu0 %562
  %v565 = vadd.f32 %v496, %v563
  %v566 = vtanh.pop %v565
  %v567 = vsub.f32 1.0, %v554
  %569 = vrot.lane.b32.xlu0 %v566, 96
  %v570 = vpop.permute.xlu0 %569
  %v572 = vmul.f32 %v567, %v570
  %v573 = vmul.f32 %v554, %v448
  %v574 = vadd.f32 %v572, %v573
  %576 = vrot.lane.b32.xlu0 %v574, 96
  %v577 = vpop.permute.xlu0 %576
  %s579 = scalar_lea.vmem %s5, 6
  %580 = vst.msk [vmem:[%s579] sm:$0x3] %vm201, %v577
  %s581 = scalar_lea.vmem %s0, 8
  %v582 = vld [vmem:[%s581] sm:$0x3]
  %v583 = vpack.c.bf16 %v582, %v582
  %v585 = vsel %vm63, %v583, 0
  %587 = vmatprep.subr.bf16.mxu0 0
  %588 = vmatpush1.bf16.msra.mxu0 0
  %589 = vmatprep.subr.bf16.mxu0 0
  %590 = vmatpush1.bf16.msra.mxu0 0
  %591 = vmatprep.subr.bf16.mxu0 0
  %592 = vmatpush1.bf16.msra.mxu0 0
  %593 = vmatprep.subr.bf16.mxu0 0
  %594 = vmatpush1.bf16.msra.mxu0 0
  %595 = vmatprep.subr.bf16.mxu0 0
  %596 = vmatpush1.bf16.msra.mxu0 0
  %597 = vmatprep.subr.bf16.mxu0 0
  %598 = vmatpush1.bf16.msra.mxu0 0
  %599 = vmatprep.subr.bf16.mxu0 0
  %600 = vmatpush1.bf16.msra.mxu0 %v60
  %601 = vmatprep.subr.bf16.mxu0 0
  %602 = vmatpush1.bf16.msra.mxu0 %v59
  %603 = vmatprep.subr.bf16.mxu0 0
  %604 = vmatpush2.bf16.msra.mxu0 0
  %605 = vmatprep.subr.bf16.mxu0 0
  %606 = vmatpush2.bf16.msra.mxu0 0
  %607 = vmatprep.subr.bf16.mxu0 0
  %608 = vmatpush2.bf16.msra.mxu0 0
  %609 = vmatprep.subr.bf16.mxu0 0
  %610 = vmatpush2.bf16.msra.mxu0 0
  %611 = vmatprep.subr.bf16.mxu0 0
  %612 = vmatpush2.bf16.msra.mxu0 0
  %613 = vmatprep.subr.bf16.mxu0 0
  %614 = vmatpush2.bf16.msra.mxu0 0
  %615 = vmatprep.subr.bf16.mxu0 0
  %616 = vmatpush2.bf16.msra.mxu0 0
  %617 = vmatprep.subr.bf16.mxu0 0
  %618 = vmatpush2.bf16.msra.mxu0 0
  %619 = vmatprep.mubr.bf16.mxu0 0
  %620 = vmatmul.mubr.bf16.gmra.mxu0 %v585
  %v621 = vpop.f32.mrf.mxu0
  %v622 = vadd.f32 %v40, %v621
  %v623 = vpop.f32.mrf.mxu0
  %v624 = vpop.f32.mrf.mxu0
  %v625 = vpop.f32.mrf.mxu0
  %626 = vdwg.mxu0
  %v627 = vpack.c.bf16 %v574, %v574
  %629 = vrot.lane.b32.xlu0 %v627, 96
  %v630 = vpop.permute.xlu0 %629
  %v632 = vsel %vm63, %v630, 0
  %634 = vmatprep.subr.bf16.mxu0 0
  %635 = vmatpush1.bf16.msra.mxu0 0
  %636 = vmatprep.subr.bf16.mxu0 0
  %637 = vmatpush1.bf16.msra.mxu0 0
  %638 = vmatprep.subr.bf16.mxu0 0
  %639 = vmatpush1.bf16.msra.mxu0 0
  %640 = vmatprep.subr.bf16.mxu0 0
  %641 = vmatpush1.bf16.msra.mxu0 0
  %642 = vmatprep.subr.bf16.mxu0 0
  %643 = vmatpush1.bf16.msra.mxu0 0
  %644 = vmatprep.subr.bf16.mxu0 0
  %645 = vmatpush1.bf16.msra.mxu0 0
  %646 = vmatprep.subr.bf16.mxu0 0
  %647 = vmatpush1.bf16.msra.mxu0 %v117
  %648 = vmatprep.subr.bf16.mxu0 0
  %649 = vmatpush1.bf16.msra.mxu0 %v116
  %650 = vmatprep.subr.bf16.mxu0 0
  %651 = vmatpush2.bf16.msra.mxu0 0
  %652 = vmatprep.subr.bf16.mxu0 0
  %653 = vmatpush2.bf16.msra.mxu0 0
  %654 = vmatprep.subr.bf16.mxu0 0
  %655 = vmatpush2.bf16.msra.mxu0 0
  %656 = vmatprep.subr.bf16.mxu0 0
  %657 = vmatpush2.bf16.msra.mxu0 0
  %658 = vmatprep.subr.bf16.mxu0 0
  %659 = vmatpush2.bf16.msra.mxu0 0
  %660 = vmatprep.subr.bf16.mxu0 0
  %661 = vmatpush2.bf16.msra.mxu0 0
  %662 = vmatprep.subr.bf16.mxu0 0
  %663 = vmatpush2.bf16.msra.mxu0 0
  %664 = vmatprep.subr.bf16.mxu0 0
  %665 = vmatpush2.bf16.msra.mxu0 0
  %666 = vmatprep.mubr.bf16.mxu0 0
  %667 = vmatmul.mubr.bf16.gmra.mxu0 %v632
  %v668 = vpop.f32.mrf.mxu0
  %v669 = vadd.f32 0.0, %v668
  %v670 = vpop.f32.mrf.mxu0
  %v671 = vpop.f32.mrf.mxu0
  %v672 = vpop.f32.mrf.mxu0
  %673 = vdwg.mxu0
  %v674 = vadd.f32 %v622, %v669
  %v675 = vxor.u32 %v674, 2147483648
  %v676 = vmul.f32 %v675, 1.442695
  %v677 = vpow.pop %v676
  %v678 = vadd.f32 %v677, 1.0
  %v679 = vrcp.pop %v678
  %v680 = vmul.f32 1.0, %v679
  %v681 = vadd.f32 %v669, %v171
  %683 = vrot.lane.b32.xlu0 %v681, 64
  %v684 = vpop.permute.xlu0 %683
  %v686 = vmul.f32 %v680, %v684
  %688 = vrot.lane.b32.xlu0 %v686, 64
  %v689 = vpop.permute.xlu0 %688
  %v691 = vadd.f32 %v622, %v689
  %v692 = vtanh.pop %v691
  %v693 = vsub.f32 1.0, %v680
  %695 = vrot.lane.b32.xlu0 %v692, 96
  %v696 = vpop.permute.xlu0 %695
  %v698 = vmul.f32 %v693, %v696
  %v699 = vmul.f32 %v680, %v574
  %v700 = vadd.f32 %v698, %v699
  %702 = vrot.lane.b32.xlu0 %v700, 96
  %v703 = vpop.permute.xlu0 %702
  %s705 = scalar_lea.vmem %s5, 8
  %706 = vst.msk [vmem:[%s705] sm:$0x3] %vm201, %v703
  %s707 = scalar_lea.vmem %s0, 10
  %v708 = vld [vmem:[%s707] sm:$0x3]
  %v709 = vpack.c.bf16 %v708, %v708
  %v711 = vsel %vm63, %v709, 0
  %713 = vmatprep.subr.bf16.mxu0 0
  %714 = vmatpush1.bf16.msra.mxu0 0
  %715 = vmatprep.subr.bf16.mxu0 0
  %716 = vmatpush1.bf16.msra.mxu0 0
  %717 = vmatprep.subr.bf16.mxu0 0
  %718 = vmatpush1.bf16.msra.mxu0 0
  %719 = vmatprep.subr.bf16.mxu0 0
  %720 = vmatpush1.bf16.msra.mxu0 0
  %721 = vmatprep.subr.bf16.mxu0 0
  %722 = vmatpush1.bf16.msra.mxu0 0
  %723 = vmatprep.subr.bf16.mxu0 0
  %724 = vmatpush1.bf16.msra.mxu0 0
  %725 = vmatprep.subr.bf16.mxu0 0
  %726 = vmatpush1.bf16.msra.mxu0 %v60
  %727 = vmatprep.subr.bf16.mxu0 0
  %728 = vmatpush1.bf16.msra.mxu0 %v59
  %729 = vmatprep.subr.bf16.mxu0 0
  %730 = vmatpush2.bf16.msra.mxu0 0
  %731 = vmatprep.subr.bf16.mxu0 0
  %732 = vmatpush2.bf16.msra.mxu0 0
  %733 = vmatprep.subr.bf16.mxu0 0
  %734 = vmatpush2.bf16.msra.mxu0 0
  %735 = vmatprep.subr.bf16.mxu0 0
  %736 = vmatpush2.bf16.msra.mxu0 0
  %737 = vmatprep.subr.bf16.mxu0 0
  %738 = vmatpush2.bf16.msra.mxu0 0
  %739 = vmatprep.subr.bf16.mxu0 0
  %740 = vmatpush2.bf16.msra.mxu0 0
  %741 = vmatprep.subr.bf16.mxu0 0
  %742 = vmatpush2.bf16.msra.mxu0 0
  %743 = vmatprep.subr.bf16.mxu0 0
  %744 = vmatpush2.bf16.msra.mxu0 0
  %745 = vmatprep.mubr.bf16.mxu0 0
  %746 = vmatmul.mubr.bf16.gmra.mxu0 %v711
  %v747 = vpop.f32.mrf.mxu0
  %v748 = vadd.f32 %v40, %v747
  %v749 = vpop.f32.mrf.mxu0
  %v750 = vpop.f32.mrf.mxu0
  %v751 = vpop.f32.mrf.mxu0
  %752 = vdwg.mxu0
  %v753 = vpack.c.bf16 %v700, %v700
  %755 = vrot.lane.b32.xlu0 %v753, 96
  %v756 = vpop.permute.xlu0 %755
  %v758 = vsel %vm63, %v756, 0
  %760 = vmatprep.subr.bf16.mxu0 0
  %761 = vmatpush1.bf16.msra.mxu0 0
  %762 = vmatprep.subr.bf16.mxu0 0
  %763 = vmatpush1.bf16.msra.mxu0 0
  %764 = vmatprep.subr.bf16.mxu0 0
  %765 = vmatpush1.bf16.msra.mxu0 0
  %766 = vmatprep.subr.bf16.mxu0 0
  %767 = vmatpush1.bf16.msra.mxu0 0
  %768 = vmatprep.subr.bf16.mxu0 0
  %769 = vmatpush1.bf16.msra.mxu0 0
  %770 = vmatprep.subr.bf16.mxu0 0
  %771 = vmatpush1.bf16.msra.mxu0 0
  %772 = vmatprep.subr.bf16.mxu0 0
  %773 = vmatpush1.bf16.msra.mxu0 %v117
  %774 = vmatprep.subr.bf16.mxu0 0
  %775 = vmatpush1.bf16.msra.mxu0 %v116
  %776 = vmatprep.subr.bf16.mxu0 0
  %777 = vmatpush2.bf16.msra.mxu0 0
  %778 = vmatprep.subr.bf16.mxu0 0
  %779 = vmatpush2.bf16.msra.mxu0 0
  %780 = vmatprep.subr.bf16.mxu0 0
  %781 = vmatpush2.bf16.msra.mxu0 0
  %782 = vmatprep.subr.bf16.mxu0 0
  %783 = vmatpush2.bf16.msra.mxu0 0
  %784 = vmatprep.subr.bf16.mxu0 0
  %785 = vmatpush2.bf16.msra.mxu0 0
  %786 = vmatprep.subr.bf16.mxu0 0
  %787 = vmatpush2.bf16.msra.mxu0 0
  %788 = vmatprep.subr.bf16.mxu0 0
  %789 = vmatpush2.bf16.msra.mxu0 0
  %790 = vmatprep.subr.bf16.mxu0 0
  %791 = vmatpush2.bf16.msra.mxu0 0
  %792 = vmatprep.mubr.bf16.mxu0 0
  %793 = vmatmul.mubr.bf16.gmra.mxu0 %v758
  %v794 = vpop.f32.mrf.mxu0
  %v795 = vadd.f32 0.0, %v794
  %v796 = vpop.f32.mrf.mxu0
  %v797 = vpop.f32.mrf.mxu0
  %v798 = vpop.f32.mrf.mxu0
  %799 = vdwg.mxu0
  %v800 = vadd.f32 %v748, %v795
  %v801 = vxor.u32 %v800, 2147483648
  %v802 = vmul.f32 %v801, 1.442695
  %v803 = vpow.pop %v802
  %v804 = vadd.f32 %v803, 1.0
  %v805 = vrcp.pop %v804
  %v806 = vmul.f32 1.0, %v805
  %v807 = vadd.f32 %v795, %v171
  %809 = vrot.lane.b32.xlu0 %v807, 64
  %v810 = vpop.permute.xlu0 %809
  %v812 = vmul.f32 %v806, %v810
  %814 = vrot.lane.b32.xlu0 %v812, 64
  %v815 = vpop.permute.xlu0 %814
  %v817 = vadd.f32 %v748, %v815
  %v818 = vtanh.pop %v817
  %v819 = vsub.f32 1.0, %v806
  %821 = vrot.lane.b32.xlu0 %v818, 96
  %v822 = vpop.permute.xlu0 %821
  %v824 = vmul.f32 %v819, %v822
  %v825 = vmul.f32 %v806, %v700
  %v826 = vadd.f32 %v824, %v825
  %828 = vrot.lane.b32.xlu0 %v826, 96
  %v829 = vpop.permute.xlu0 %828
  %s831 = scalar_lea.vmem %s5, 10
  %832 = vst.msk [vmem:[%s831] sm:$0x3] %vm201, %v829
  %s833 = scalar_lea.vmem %s0, 12
  %v834 = vld [vmem:[%s833] sm:$0x3]
  %v835 = vpack.c.bf16 %v834, %v834
  %v837 = vsel %vm63, %v835, 0
  %839 = vmatprep.subr.bf16.mxu0 0
  %840 = vmatpush1.bf16.msra.mxu0 0
  %841 = vmatprep.subr.bf16.mxu0 0
  %842 = vmatpush1.bf16.msra.mxu0 0
  %843 = vmatprep.subr.bf16.mxu0 0
  %844 = vmatpush1.bf16.msra.mxu0 0
  %845 = vmatprep.subr.bf16.mxu0 0
  %846 = vmatpush1.bf16.msra.mxu0 0
  %847 = vmatprep.subr.bf16.mxu0 0
  %848 = vmatpush1.bf16.msra.mxu0 0
  %849 = vmatprep.subr.bf16.mxu0 0
  %850 = vmatpush1.bf16.msra.mxu0 0
  %851 = vmatprep.subr.bf16.mxu0 0
  %852 = vmatpush1.bf16.msra.mxu0 %v60
  %853 = vmatprep.subr.bf16.mxu0 0
  %854 = vmatpush1.bf16.msra.mxu0 %v59
  %855 = vmatprep.subr.bf16.mxu0 0
  %856 = vmatpush2.bf16.msra.mxu0 0
  %857 = vmatprep.subr.bf16.mxu0 0
  %858 = vmatpush2.bf16.msra.mxu0 0
  %859 = vmatprep.subr.bf16.mxu0 0
  %860 = vmatpush2.bf16.msra.mxu0 0
  %861 = vmatprep.subr.bf16.mxu0 0
  %862 = vmatpush2.bf16.msra.mxu0 0
  %863 = vmatprep.subr.bf16.mxu0 0
  %864 = vmatpush2.bf16.msra.mxu0 0
  %865 = vmatprep.subr.bf16.mxu0 0
  %866 = vmatpush2.bf16.msra.mxu0 0
  %867 = vmatprep.subr.bf16.mxu0 0
  %868 = vmatpush2.bf16.msra.mxu0 0
  %869 = vmatprep.subr.bf16.mxu0 0
  %870 = vmatpush2.bf16.msra.mxu0 0
  %871 = vmatprep.mubr.bf16.mxu0 0
  %872 = vmatmul.mubr.bf16.gmra.mxu0 %v837
  %v873 = vpop.f32.mrf.mxu0
  %v874 = vadd.f32 %v40, %v873
  %v875 = vpop.f32.mrf.mxu0
  %v876 = vpop.f32.mrf.mxu0
  %v877 = vpop.f32.mrf.mxu0
  %878 = vdwg.mxu0
  %v879 = vpack.c.bf16 %v826, %v826
  %881 = vrot.lane.b32.xlu0 %v879, 96
  %v882 = vpop.permute.xlu0 %881
  %v884 = vsel %vm63, %v882, 0
  %886 = vmatprep.subr.bf16.mxu0 0
  %887 = vmatpush1.bf16.msra.mxu0 0
  %888 = vmatprep.subr.bf16.mxu0 0
  %889 = vmatpush1.bf16.msra.mxu0 0
  %890 = vmatprep.subr.bf16.mxu0 0
  %891 = vmatpush1.bf16.msra.mxu0 0
  %892 = vmatprep.subr.bf16.mxu0 0
  %893 = vmatpush1.bf16.msra.mxu0 0
  %894 = vmatprep.subr.bf16.mxu0 0
  %895 = vmatpush1.bf16.msra.mxu0 0
  %896 = vmatprep.subr.bf16.mxu0 0
  %897 = vmatpush1.bf16.msra.mxu0 0
  %898 = vmatprep.subr.bf16.mxu0 0
  %899 = vmatpush1.bf16.msra.mxu0 %v117
  %900 = vmatprep.subr.bf16.mxu0 0
  %901 = vmatpush1.bf16.msra.mxu0 %v116
  %902 = vmatprep.subr.bf16.mxu0 0
  %903 = vmatpush2.bf16.msra.mxu0 0
  %904 = vmatprep.subr.bf16.mxu0 0
  %905 = vmatpush2.bf16.msra.mxu0 0
  %906 = vmatprep.subr.bf16.mxu0 0
  %907 = vmatpush2.bf16.msra.mxu0 0
  %908 = vmatprep.subr.bf16.mxu0 0
  %909 = vmatpush2.bf16.msra.mxu0 0
  %910 = vmatprep.subr.bf16.mxu0 0
  %911 = vmatpush2.bf16.msra.mxu0 0
  %912 = vmatprep.subr.bf16.mxu0 0
  %913 = vmatpush2.bf16.msra.mxu0 0
  %914 = vmatprep.subr.bf16.mxu0 0
  %915 = vmatpush2.bf16.msra.mxu0 0
  %916 = vmatprep.subr.bf16.mxu0 0
  %917 = vmatpush2.bf16.msra.mxu0 0
  %918 = vmatprep.mubr.bf16.mxu0 0
  %919 = vmatmul.mubr.bf16.gmra.mxu0 %v884
  %v920 = vpop.f32.mrf.mxu0
  %v921 = vadd.f32 0.0, %v920
  %v922 = vpop.f32.mrf.mxu0
  %v923 = vpop.f32.mrf.mxu0
  %v924 = vpop.f32.mrf.mxu0
  %925 = vdwg.mxu0
  %v926 = vadd.f32 %v874, %v921
  %v927 = vxor.u32 %v926, 2147483648
  %v928 = vmul.f32 %v927, 1.442695
  %v929 = vpow.pop %v928
  %v930 = vadd.f32 %v929, 1.0
  %v931 = vrcp.pop %v930
  %v932 = vmul.f32 1.0, %v931
  %v933 = vadd.f32 %v921, %v171
  %935 = vrot.lane.b32.xlu0 %v933, 64
  %v936 = vpop.permute.xlu0 %935
  %v938 = vmul.f32 %v932, %v936
  %940 = vrot.lane.b32.xlu0 %v938, 64
  %v941 = vpop.permute.xlu0 %940
  %v943 = vadd.f32 %v874, %v941
  %v944 = vtanh.pop %v943
  %v945 = vsub.f32 1.0, %v932
  %947 = vrot.lane.b32.xlu0 %v944, 96
  %v948 = vpop.permute.xlu0 %947
  %v950 = vmul.f32 %v945, %v948
  %v951 = vmul.f32 %v932, %v826
  %v952 = vadd.f32 %v950, %v951
  %954 = vrot.lane.b32.xlu0 %v952, 96
  %v955 = vpop.permute.xlu0 %954
  %s957 = scalar_lea.vmem %s5, 12
  %958 = vst.msk [vmem:[%s957] sm:$0x3] %vm201, %v955
  %s959 = scalar_lea.vmem %s0, 14
  %v960 = vld [vmem:[%s959] sm:$0x3]
  %v961 = vpack.c.bf16 %v960, %v960
  %v963 = vsel %vm63, %v961, 0
  %965 = vmatprep.subr.bf16.mxu0 0
  %966 = vmatpush1.bf16.msra.mxu0 0
  %967 = vmatprep.subr.bf16.mxu0 0
  %968 = vmatpush1.bf16.msra.mxu0 0
  %969 = vmatprep.subr.bf16.mxu0 0
  %970 = vmatpush1.bf16.msra.mxu0 0
  %971 = vmatprep.subr.bf16.mxu0 0
  %972 = vmatpush1.bf16.msra.mxu0 0
  %973 = vmatprep.subr.bf16.mxu0 0
  %974 = vmatpush1.bf16.msra.mxu0 0
  %975 = vmatprep.subr.bf16.mxu0 0
  %976 = vmatpush1.bf16.msra.mxu0 0
  %977 = vmatprep.subr.bf16.mxu0 0
  %978 = vmatpush1.bf16.msra.mxu0 %v60
  %979 = vmatprep.subr.bf16.mxu0 0
  %980 = vmatpush1.bf16.msra.mxu0 %v59
  %981 = vmatprep.subr.bf16.mxu0 0
  %982 = vmatpush2.bf16.msra.mxu0 0
  %983 = vmatprep.subr.bf16.mxu0 0
  %984 = vmatpush2.bf16.msra.mxu0 0
  %985 = vmatprep.subr.bf16.mxu0 0
  %986 = vmatpush2.bf16.msra.mxu0 0
  %987 = vmatprep.subr.bf16.mxu0 0
  %988 = vmatpush2.bf16.msra.mxu0 0
  %989 = vmatprep.subr.bf16.mxu0 0
  %990 = vmatpush2.bf16.msra.mxu0 0
  %991 = vmatprep.subr.bf16.mxu0 0
  %992 = vmatpush2.bf16.msra.mxu0 0
  %993 = vmatprep.subr.bf16.mxu0 0
  %994 = vmatpush2.bf16.msra.mxu0 0
  %995 = vmatprep.subr.bf16.mxu0 0
  %996 = vmatpush2.bf16.msra.mxu0 0
  %997 = vmatprep.mubr.bf16.mxu0 0
  %998 = vmatmul.mubr.bf16.gmra.mxu0 %v963
  %v999 = vpop.f32.mrf.mxu0
  %v1000 = vadd.f32 %v40, %v999
  %v1001 = vpop.f32.mrf.mxu0
  %v1002 = vpop.f32.mrf.mxu0
  %v1003 = vpop.f32.mrf.mxu0
  %1004 = vdwg.mxu0
  %v1005 = vpack.c.bf16 %v952, %v952
  %1007 = vrot.lane.b32.xlu0 %v1005, 96
  %v1008 = vpop.permute.xlu0 %1007
  %v1010 = vsel %vm63, %v1008, 0
  %1012 = vmatprep.subr.bf16.mxu0 0
  %1013 = vmatpush1.bf16.msra.mxu0 0
  %1014 = vmatprep.subr.bf16.mxu0 0
  %1015 = vmatpush1.bf16.msra.mxu0 0
  %1016 = vmatprep.subr.bf16.mxu0 0
  %1017 = vmatpush1.bf16.msra.mxu0 0
  %1018 = vmatprep.subr.bf16.mxu0 0
  %1019 = vmatpush1.bf16.msra.mxu0 0
  %1020 = vmatprep.subr.bf16.mxu0 0
  %1021 = vmatpush1.bf16.msra.mxu0 0
  %1022 = vmatprep.subr.bf16.mxu0 0
  %1023 = vmatpush1.bf16.msra.mxu0 0
  %1024 = vmatprep.subr.bf16.mxu0 0
  %1025 = vmatpush1.bf16.msra.mxu0 %v117
  %1026 = vmatprep.subr.bf16.mxu0 0
  %1027 = vmatpush1.bf16.msra.mxu0 %v116
  %1028 = vmatprep.subr.bf16.mxu0 0
  %1029 = vmatpush2.bf16.msra.mxu0 0
  %1030 = vmatprep.subr.bf16.mxu0 0
  %1031 = vmatpush2.bf16.msra.mxu0 0
  %1032 = vmatprep.subr.bf16.mxu0 0
  %1033 = vmatpush2.bf16.msra.mxu0 0
  %1034 = vmatprep.subr.bf16.mxu0 0
  %1035 = vmatpush2.bf16.msra.mxu0 0
  %1036 = vmatprep.subr.bf16.mxu0 0
  %1037 = vmatpush2.bf16.msra.mxu0 0
  %1038 = vmatprep.subr.bf16.mxu0 0
  %1039 = vmatpush2.bf16.msra.mxu0 0
  %1040 = vmatprep.subr.bf16.mxu0 0
  %1041 = vmatpush2.bf16.msra.mxu0 0
  %1042 = vmatprep.subr.bf16.mxu0 0
  %1043 = vmatpush2.bf16.msra.mxu0 0
  %1044 = vmatprep.mubr.bf16.mxu0 0
  %1045 = vmatmul.mubr.bf16.gmra.mxu0 %v1010
  %v1046 = vpop.f32.mrf.mxu0
  %v1047 = vadd.f32 0.0, %v1046
  %v1048 = vpop.f32.mrf.mxu0
  %v1049 = vpop.f32.mrf.mxu0
  %v1050 = vpop.f32.mrf.mxu0
  %1051 = vdwg.mxu0
  %v1052 = vadd.f32 %v1000, %v1047
  %v1053 = vxor.u32 %v1052, 2147483648
  %v1054 = vmul.f32 %v1053, 1.442695
  %v1055 = vpow.pop %v1054
  %v1056 = vadd.f32 %v1055, 1.0
  %v1057 = vrcp.pop %v1056
  %v1058 = vmul.f32 1.0, %v1057
  %v1059 = vadd.f32 %v1047, %v171
  %1061 = vrot.lane.b32.xlu0 %v1059, 64
  %v1062 = vpop.permute.xlu0 %1061
  %v1064 = vmul.f32 %v1058, %v1062
  %1066 = vrot.lane.b32.xlu0 %v1064, 64
  %v1067 = vpop.permute.xlu0 %1066
  %v1069 = vadd.f32 %v1000, %v1067
  %v1070 = vtanh.pop %v1069
  %v1071 = vsub.f32 1.0, %v1058
  %1073 = vrot.lane.b32.xlu0 %v1070, 96
  %v1074 = vpop.permute.xlu0 %1073
  %v1076 = vmul.f32 %v1071, %v1074
  %v1077 = vmul.f32 %v1058, %v952
  %v1078 = vadd.f32 %v1076, %v1077
  %1080 = vrot.lane.b32.xlu0 %v1078, 96
  %v1081 = vpop.permute.xlu0 %1080
  %s1083 = scalar_lea.vmem %s5, 14
  %1084 = vst.msk [vmem:[%s1083] sm:$0x3] %vm201, %v1081
  %1085 = vst.msk [vmem:[#allocation2] sm:$0x3] %vm201, %v1081
  // Predicated region
  $region26: #{seq2seq_encoder_forward.2} parent=0 // pred_check
    _
  $region27: #{seq2seq_encoder_forward.2} parent=0 // pred_check_branch
    %1087 = sbr.rel (0) target = $region29
  $region28: #{seq2seq_encoder_forward.2} parent=0 // pred_region
    _
  $region29: #{seq2seq_encoder_forward.2} parent=0 // pred_fallthru
    _
  // Predicated region
  $region30: #{seq2seq_encoder_forward.2} parent=0 // pred_check
    _
  $region31: #{seq2seq_encoder_forward.2} parent=0 // pred_check_branch
    %1089 = sbr.rel (0) target = $region33
  $region32: #{seq2seq_encoder_forward.2} parent=0 // pred_region
    _
  $region33: #{seq2seq_encoder_forward.2} parent=0 // pred_fallthru
    _

</llo_original>
